<compile_context>
chip_gen: v6e
topology: v6e:2x2x1
jax: 0.10.0
libtpu: 0.0.40
codegen_flags: <defaults>
</compile_context>

<pallas_src>
import functools
import math

import jax
import jax.numpy as jnp
from jax.experimental import pallas as pl
from jax.experimental.pallas import tpu as pltpu


# ----------------------------------------------------------------------------
# Static length bookkeeping (mirrors dilate()'s right-padding)
# ----------------------------------------------------------------------------

def build_dilations(layers, blocks):
    dil = []
    init_dilation = 1
    for _ in range(blocks):
        new_dilation = 1
        for _ in range(layers):
            dil.append((new_dilation, init_dilation))
            init_dilation = new_dilation
            new_dilation *= 2
    return dil


def _window_plan(L, dilations, l_out):
    """Static per-layer tail-window plan.

    Returns (wplan, lb, w0, wbuf_len) where wplan[i] = (wcur, pad, wp, wo) are
    window-coordinate lengths for layer i (rows counted from global row
    lb = skip_len - l_out).  Layers whose window only sees zero padding are
    dropped (their contribution to the emitted rows is exactly zero).
    """
    plan = []
    Lcur = L
    for d, _ in dilations:
        pad = (d - Lcur % d) % d
        Lp = Lcur + pad
        Lo = Lp - 1
        plan.append((Lcur, pad, Lp, Lo))
        Lcur = Lo
    skip_len = max(p[3] for p in plan)
    assert l_out <= skip_len, "output_length longer than produced sequence"
    lb = skip_len - l_out          # first skip row that reaches the output

    wplan = []
    for (Lcur_i, pad, Lp, Lo) in plan:
        # Need real (non-pad) residual data above lb and at least one output
        # row above lb; once that fails, every later layer contributes zero
        # to the emitted rows (zeros propagate zeros through tanh*sigmoid).
        if Lcur_i <= lb or Lo <= lb:
            break
        wplan.append((Lcur_i - lb, pad, Lp - lb, Lo - lb))
    w0 = max(L - lb, 0)
    wbuf_len = max([max(w0, 1)] + [w[2] for w in wplan])
    return tuple(wplan), lb, w0, wbuf_len


# ----------------------------------------------------------------------------
# Fused Pallas kernel: start_conv + all (active) layers + skip sum + end convs
# ----------------------------------------------------------------------------

def _wavenet_fused_kernel(x_ref, wstart_ref, wtap_ref, wrs_ref,
                          we1_ref, be1_ref, we2_ref, be2_ref,
                          out_ref, x_buf, skip_buf,
                          *, wplan, w0, R, D):
    # Running skip accumulator for the emitted rows only (end-padded-sum
    # semantics: every layer adds at the front of a zero buffer).
    skip_buf[...] = jnp.zeros_like(skip_buf)

    if w0 > 0 and wplan:
        # ---- start_conv (1x1, bias=False) on the tail rows: (w0,C)@(C,R) ----
        x_buf[pl.ds(0, w0), :] = jnp.dot(
            x_ref[0], wstart_ref[...], preferred_element_type=jnp.float32)

        n_act = len(wplan)
        # ---- gated residual layers (static unroll; all lengths static) ----
        for i, (wcur, pad, wp, wo) in enumerate(wplan):
            if pad:  # dilate(): right-pad the residual with zeros
                x_buf[pl.ds(wcur, pad), :] = jnp.zeros((pad, R), jnp.float32)
            r0 = x_buf[pl.ds(0, wo), :]        # residual[t]
            r1 = x_buf[pl.ds(1, wo), :]        # residual[t+1]
            # filter & gate packed into one (R, 2D) weight per tap
            pre = (jnp.dot(r0, wtap_ref[2 * i],
                           preferred_element_type=jnp.float32)
                   + jnp.dot(r1, wtap_ref[2 * i + 1],
                             preferred_element_type=jnp.float32))   # (wo, 2D)
            z = jnp.tanh(pre[:, :D]) * jax.nn.sigmoid(pre[:, D:])   # (wo, D)
            # residual 1x1 and skip 1x1 packed into one (D, R+S) weight
            rs = jnp.dot(z, wrs_ref[i], preferred_element_type=jnp.float32)
            skip_buf[pl.ds(0, wo), :] = skip_buf[pl.ds(0, wo), :] + rs[:, R:]
            if i + 1 < n_act:                  # last layer's residual is unused
                x_buf[pl.ds(0, wo), :] = rs[:, :R] + r1   # x + residual[:,1:]

    # ---- relu -> end_conv_1 -> relu -> end_conv_2 on the emitted rows ----
    h = jnp.maximum(skip_buf[...], 0.0)
    h = jnp.dot(h, we1_ref[...], preferred_element_type=jnp.float32) + be1_ref[...]
    h = jnp.maximum(h, 0.0)
    h = jnp.dot(h, we2_ref[...], preferred_element_type=jnp.float32) + be2_ref[...]
    out_ref[0] = h.astype(out_ref.dtype)


# ----------------------------------------------------------------------------
# Wrapper
# ----------------------------------------------------------------------------

def wavenet_forward(x_ncl, params, cfg):
    """x_ncl: (N, classes, L) like the PyTorch module. Returns (N*output_length, classes)."""
    N, C, L = x_ncl.shape
    R = cfg["residual_channels"]
    D = cfg["dilation_channels"]
    S = cfg["skip_channels"]
    E = cfg["end_channels"]
    cls = cfg["classes"]
    l_out = cfg["output_length"]
    dil = cfg["dilations"]

    wplan, lb, w0, wbuf_len = _window_plan(L, dil, l_out)
    n_act = len(wplan)

    # Only the last (L - lb) input timesteps can influence the output.
    tail = max(w0, 1)
    x = jnp.transpose(x_ncl, (0, 2, 1)).astype(jnp.float32)       # NCL -> NLC
    x = x[:, L - tail:, :]                                        # (N, tail, C)

    # Pack weights for the ACTIVE layers only:
    #   per-tap [filter | gate] -> (2*n_act, R, 2D), [residual | skip] -> (n_act, D, R+S)
    if n_act > 0:
        wtap = jnp.stack(
            [jnp.concatenate([params["wf"][i][k], params["wg"][i][k]], axis=1)
             for i in range(n_act) for k in range(2)], axis=0)
        wrs = jnp.stack(
            [jnp.concatenate([params["wr"][i], params["ws"][i]], axis=1)
             for i in range(n_act)], axis=0)
    else:  # degenerate config: no layer reaches the emitted rows
        wtap = jnp.zeros((2, R, 2 * D), jnp.float32)
        wrs = jnp.zeros((1, D, R + S), jnp.float32)

    kernel = functools.partial(_wavenet_fused_kernel, wplan=wplan,
                               w0=w0, R=R, D=D)

    out = pl.pallas_call(
        kernel,
        out_shape=jax.ShapeDtypeStruct((N, l_out, cls), jnp.float32),
        grid=(N,),
        in_specs=[
            pl.BlockSpec((1, tail, C), lambda n: (n, 0, 0)),
            pl.BlockSpec((C, R), lambda n: (0, 0)),
            pl.BlockSpec(wtap.shape, lambda n: (0, 0, 0)),
            pl.BlockSpec(wrs.shape, lambda n: (0, 0, 0)),
            pl.BlockSpec((S, E), lambda n: (0, 0)),
            pl.BlockSpec((1, E), lambda n: (0, 0)),
            pl.BlockSpec((E, cls), lambda n: (0, 0)),
            pl.BlockSpec((1, cls), lambda n: (0, 0)),
        ],
        out_specs=pl.BlockSpec((1, l_out, cls), lambda n: (n, 0, 0)),
        scratch_shapes=[
            pltpu.VMEM((wbuf_len, R), jnp.float32),   # residual activation (tail window)
            pltpu.VMEM((l_out, S), jnp.float32),      # running skip sum (emitted rows)
        ],
        compiler_params=pltpu.CompilerParams(
            dimension_semantics=("parallel",)),       # 2 TCs split the batch
    )(x, params["w_start"], wtap, wrs,
      params["w_end1"], params["b_end1"].reshape(1, E),
      params["w_end2"], params["b_end2"].reshape(1, cls))

    # == x[:, :, -l:].transpose(1, 2).contiguous().view(n*l, c)
    return out.reshape(N * l_out, cls)


# ----------------------------------------------------------------------------
# Pure-JAX reference (mirrors the PyTorch forward) for validation
# ----------------------------------------------------------------------------

def wavenet_forward_reference(x_ncl, params, cfg):
    hi = jax.lax.Precision.HIGHEST
    N, C, L = x_ncl.shape
    x = jnp.transpose(x_ncl, (0, 2, 1)).astype(jnp.float32)
    x = jnp.dot(x, params["w_start"], precision=hi)
    skip = None
    for i, (d, _) in enumerate(cfg["dilations"]):
        Lcur = x.shape[1]
        pad = (d - Lcur % d) % d
        res = jnp.pad(x, ((0, 0), (0, pad), (0, 0))) if pad else x
        r0, r1 = res[:, :-1, :], res[:, 1:, :]
        f = jnp.tanh(jnp.dot(r0, params["wf"][i][0], precision=hi)
                     + jnp.dot(r1, params["wf"][i][1], precision=hi))
        g = jax.nn.sigmoid(jnp.dot(r0, params["wg"][i][0], precision=hi)
                           + jnp.dot(r1, params["wg"][i][1], precision=hi))
        z = f * g
        s = jnp.dot(z, params["ws"][i], precision=hi)
        if skip is None:
            skip = s
        else:
            ls, lk = s.shape[1], skip.shape[1]
            if ls < lk:
                s = jnp.pad(s, ((0, 0), (0, lk - ls), (0, 0)))
            elif lk < ls:
                skip = jnp.pad(skip, ((0, 0), (0, ls - lk), (0, 0)))
            skip = skip + s
        x = jnp.dot(z, params["wr"][i], precision=hi) + r1
    h = jnp.maximum(skip, 0.0)
    h = jnp.maximum(jnp.dot(h, params["w_end1"], precision=hi) + params["b_end1"], 0.0)
    h = jnp.dot(h, params["w_end2"], precision=hi) + params["b_end2"]
    out = h[:, -cfg["output_length"]:, :]
    return out.reshape(N * cfg["output_length"], cfg["classes"])


# ----------------------------------------------------------------------------
# Deterministic parameter init (shapes follow the module's __init__)
# ----------------------------------------------------------------------------

def _uni(key, shape, fan_in):
    bound = 1.0 / math.sqrt(fan_in)
    return jax.random.uniform(key, shape, jnp.float32, -bound, bound)


def init_params(key, cfg):
    R = cfg["residual_channels"]
    D = cfg["dilation_channels"]
    S = cfg["skip_channels"]
    E = cfg["end_channels"]
    C = cfg["classes"]
    K = cfg["kernel_size"]
    n_layers = cfg["layers"] * cfg["blocks"]

    keys = iter(jax.random.split(key, 1 + 4 * n_layers + 4))
    p = {"w_start": _uni(next(keys), (C, R), C),
         "wf": [], "wg": [], "wr": [], "ws": []}
    for _ in range(n_layers):
        p["wf"].append(_uni(next(keys), (K, R, D), R * K))   # tap k: (R, D)
        p["wg"].append(_uni(next(keys), (K, R, D), R * K))
        p["wr"].append(_uni(next(keys), (D, R), D))
        p["ws"].append(_uni(next(keys), (D, S), D))
    p["w_end1"] = _uni(next(keys), (S, E), S)
    p["b_end1"] = _uni(next(keys), (E,), S)
    p["w_end2"] = _uni(next(keys), (E, C), E)
    p["b_end2"] = _uni(next(keys), (C,), E)
    return p


# ----------------------------------------------------------------------------

def _run_and_check(cfg, L_in, N, key):
    cfg = dict(cfg)
    cfg["dilations"] = build_dilations(cfg["layers"], cfg["blocks"])
    k_params, k_in = jax.random.split(key)
    params = init_params(k_params, cfg)
    x = jax.random.normal(k_in, (N, cfg["classes"], L_in), jnp.float32)

    fwd = jax.jit(functools.partial(wavenet_forward, cfg=cfg))
    out = jax.block_until_ready(fwd(x, params))

    assert out.shape == (N * cfg["output_length"], cfg["classes"]), out.shape
    assert bool(jnp.all(jnp.isfinite(out)))

    ref = wavenet_forward_reference(x, params, cfg)
    assert bool(jnp.allclose(out, ref, rtol=1e-2, atol=1e-2)), (
        "max abs diff vs reference: %g" % float(jnp.max(jnp.abs(out - ref))))
    return out


if __name__ == "__main__":
    key = jax.random.PRNGKey(0)
    k1, k2 = jax.random.split(key)

    # Config 1: all layers reach the emitted tail window.
    cfg1 = dict(layers=2, blocks=2, dilation_channels=8, residual_channels=8,
                skip_channels=16, end_channels=16, classes=16, output_length=4,
                kernel_size=2)
    _run_and_check(cfg1, L_in=16, N=2, key=k1)

    # Config 2: deeper net + short output_length -> exercises the tail-window
    # pruning path (later layers provably contribute zero and are dropped).
    cfg2 = dict(layers=2, blocks=4, dilation_channels=8, residual_channels=8,
                skip_channels=16, end_channels=16, classes=16, output_length=2,
                kernel_size=2)
    _run_and_check(cfg2, L_in=16, N=2, key=k2)

    # TODO(synk): generate()/generate_fast() autoregressive sampling
    # (DilatedQueue state, np.random.choice) are host-side Python loops,
    # not part of forward(); intentionally not implemented as kernels.
    print("KERNEL_OK")
</pallas_src>

<mosaic_0001>
module attributes {stable_mosaic.version = 11 : i64} {
  func.func @_wavenet_fused_kernel(%arg0: i32, %arg1: memref<1x5x16xf32, #tpu.memory_space<vmem>>, %arg2: memref<16x8xf32, #tpu.memory_space<vmem>>, %arg3: memref<8x8x16xf32, #tpu.memory_space<vmem>>, %arg4: memref<4x8x24xf32, #tpu.memory_space<vmem>>, %arg5: memref<16x16xf32, #tpu.memory_space<vmem>>, %arg6: memref<1x16xf32, #tpu.memory_space<vmem>>, %arg7: memref<16x16xf32, #tpu.memory_space<vmem>>, %arg8: memref<1x16xf32, #tpu.memory_space<vmem>>, %arg9: memref<1x4x16xf32, #tpu.memory_space<vmem>>, %arg10: memref<5x8xf32, #tpu.memory_space<vmem>>, %arg11: memref<4x16xf32, #tpu.memory_space<vmem>>) attributes {dimension_semantics = [#tpu.dimension_semantics<parallel>], iteration_bounds = array<i64: 2>, scalar_prefetch = 0 : i64, scratch_operands = 2 : i64, tpu.core_type = #tpu.core_type<tc>, window_params = [{transform_indices = @transform_0, window_bounds = array<i64: 1, 5, 16>}, {pipeline_mode = #tpu.pipeline_mode<synchronous>, transform_indices = @transform_1, window_bounds = array<i64: 16, 8>}, {pipeline_mode = #tpu.pipeline_mode<synchronous>, transform_indices = @transform_2, window_bounds = array<i64: 8, 8, 16>}, {pipeline_mode = #tpu.pipeline_mode<synchronous>, transform_indices = @transform_3, window_bounds = array<i64: 4, 8, 24>}, {pipeline_mode = #tpu.pipeline_mode<synchronous>, transform_indices = @transform_4, window_bounds = array<i64: 16, 16>}, {pipeline_mode = #tpu.pipeline_mode<synchronous>, transform_indices = @transform_5, window_bounds = array<i64: 1, 16>}, {pipeline_mode = #tpu.pipeline_mode<synchronous>, transform_indices = @transform_6, window_bounds = array<i64: 16, 16>}, {pipeline_mode = #tpu.pipeline_mode<synchronous>, transform_indices = @transform_7, window_bounds = array<i64: 1, 16>}, {transform_indices = @transform_8, window_bounds = array<i64: 1, 4, 16>}]} {
    %cst = arith.constant 0.000000e+00 : f32
    %0 = vector.broadcast %cst : f32 to vector<4x16xf32>
    %c0 = arith.constant 0 : index
    %c0_0 = arith.constant 0 : index
    %1 = vector.load %arg11[%c0, %c0_0] : memref<4x16xf32, #tpu.memory_space<vmem>>, vector<4x16xf32>
    tpu.vector_store %arg11[%c0, %c0_0], %0 {strides = array<i32>} : memref<4x16xf32, #tpu.memory_space<vmem>>, vector<4x16xf32>,
    %c0_1 = arith.constant 0 : index
    %c0_2 = arith.constant 0 : index
    %c0_3 = arith.constant 0 : index
    %2 = vector.load %arg1[%c0_1, %c0_2, %c0_3] : memref<1x5x16xf32, #tpu.memory_space<vmem>>, vector<1x5x16xf32>
    %3 = vector.shape_cast %2 : vector<1x5x16xf32> to vector<5x16xf32>
    %c0_4 = arith.constant 0 : index
    %c0_5 = arith.constant 0 : index
    %4 = vector.load %arg2[%c0_4, %c0_5] : memref<16x8xf32, #tpu.memory_space<vmem>>, vector<16x8xf32>
    %cst_6 = arith.constant dense<0.000000e+00> : vector<5x8xf32>
    %5 = tpu.matmul %3, %4, %cst_6 {dimension_numbers = #tpu.dot_dimension_numbers<[1], [0], [0], [1], [0, 0, 1, 1], [], []>} : vector<5x16xf32>, vector<16x8xf32>, vector<5x8xf32> -> vector<5x8xf32>
    %c0_7 = arith.constant 0 : index
    %c0_8 = arith.constant 0 : index
    %6 = vector.load %arg10[%c0_7, %c0_8] : memref<5x8xf32, #tpu.memory_space<vmem>>, vector<5x8xf32>
    tpu.vector_store %arg10[%c0_7, %c0_8], %5 {strides = array<i32>} : memref<5x8xf32, #tpu.memory_space<vmem>>, vector<5x8xf32>,
    %c0_9 = arith.constant 0 : index
    %c0_10 = arith.constant 0 : index
    %7 = vector.load %arg10[%c0_9, %c0_10] : memref<5x8xf32, #tpu.memory_space<vmem>>, vector<4x8xf32>
    %c1 = arith.constant 1 : index
    %c0_11 = arith.constant 0 : index
    %8 = vector.load %arg10[%c1, %c0_11] : memref<5x8xf32, #tpu.memory_space<vmem>>, vector<4x8xf32>
    %c0_12 = arith.constant 0 : index
    %c0_13 = arith.constant 0 : index
    %c0_14 = arith.constant 0 : index
    %9 = vector.load %arg3[%c0_12, %c0_13, %c0_14] : memref<8x8x16xf32, #tpu.memory_space<vmem>>, vector<1x8x16xf32>
    %10 = vector.shape_cast %9 : vector<1x8x16xf32> to vector<8x16xf32>
    %cst_15 = arith.constant dense<0.000000e+00> : vector<4x16xf32>
    %11 = tpu.matmul %7, %10, %cst_15 {dimension_numbers = #tpu.dot_dimension_numbers<[1], [0], [0], [1], [0, 0, 1, 1], [], []>} : vector<4x8xf32>, vector<8x16xf32>, vector<4x16xf32> -> vector<4x16xf32>
    %c1_16 = arith.constant 1 : index
    %c0_17 = arith.constant 0 : index
    %c0_18 = arith.constant 0 : index
    %12 = vector.load %arg3[%c1_16, %c0_17, %c0_18] : memref<8x8x16xf32, #tpu.memory_space<vmem>>, vector<1x8x16xf32>
    %13 = vector.shape_cast %12 : vector<1x8x16xf32> to vector<8x16xf32>
    %cst_19 = arith.constant dense<0.000000e+00> : vector<4x16xf32>
    %14 = tpu.matmul %8, %13, %cst_19 {dimension_numbers = #tpu.dot_dimension_numbers<[1], [0], [0], [1], [0, 0, 1, 1], [], []>} : vector<4x8xf32>, vector<8x16xf32>, vector<4x16xf32> -> vector<4x16xf32>
    %15 = arith.addf %11, %14 : vector<4x16xf32>
    %16 = vector.extract_strided_slice %15 {offsets = [0, 0], sizes = [4, 8], strides = [1, 1]} : vector<4x16xf32> to vector<4x8xf32>
    %17 = math.tanh %16 : vector<4x8xf32>
    %18 = vector.extract_strided_slice %15 {offsets = [0, 8], sizes = [4, 8], strides = [1, 1]} : vector<4x16xf32> to vector<4x8xf32>
    %19 = arith.negf %18 : vector<4x8xf32>
    %20 = math.exp %19 : vector<4x8xf32>
    %cst_20 = arith.constant 1.000000e+00 : f32
    %21 = vector.broadcast %cst_20 : f32 to vector<4x8xf32>
    %22 = arith.addf %21, %20 : vector<4x8xf32>
    %23 = arith.divf %21, %22 : vector<4x8xf32>
    %24 = arith.mulf %17, %23 : vector<4x8xf32>
    %c0_21 = arith.constant 0 : index
    %c0_22 = arith.constant 0 : index
    %c0_23 = arith.constant 0 : index
    %25 = vector.load %arg4[%c0_21, %c0_22, %c0_23] : memref<4x8x24xf32, #tpu.memory_space<vmem>>, vector<1x8x24xf32>
    %26 = vector.shape_cast %25 : vector<1x8x24xf32> to vector<8x24xf32>
    %cst_24 = arith.constant dense<0.000000e+00> : vector<4x24xf32>
    %27 = tpu.matmul %24, %26, %cst_24 {dimension_numbers = #tpu.dot_dimension_numbers<[1], [0], [0], [1], [0, 0, 1, 1], [], []>} : vector<4x8xf32>, vector<8x24xf32>, vector<4x24xf32> -> vector<4x24xf32>
    %c0_25 = arith.constant 0 : index
    %c0_26 = arith.constant 0 : index
    %28 = vector.load %arg11[%c0_25, %c0_26] : memref<4x16xf32, #tpu.memory_space<vmem>>, vector<4x16xf32>
    %29 = vector.extract_strided_slice %27 {offsets = [0, 8], sizes = [4, 16], strides = [1, 1]} : vector<4x24xf32> to vector<4x16xf32>
    %30 = arith.addf %28, %29 : vector<4x16xf32>
    %c0_27 = arith.constant 0 : index
    %c0_28 = arith.constant 0 : index
    %31 = vector.load %arg11[%c0_27, %c0_28] : memref<4x16xf32, #tpu.memory_space<vmem>>, vector<4x16xf32>
    tpu.vector_store %arg11[%c0_27, %c0_28], %30 {strides = array<i32>} : memref<4x16xf32, #tpu.memory_space<vmem>>, vector<4x16xf32>,
    %32 = vector.extract_strided_slice %27 {offsets = [0, 0], sizes = [4, 8], strides = [1, 1]} : vector<4x24xf32> to vector<4x8xf32>
    %33 = arith.addf %32, %8 : vector<4x8xf32>
    %c0_29 = arith.constant 0 : index
    %c0_30 = arith.constant 0 : index
    %34 = vector.load %arg10[%c0_29, %c0_30] : memref<5x8xf32, #tpu.memory_space<vmem>>, vector<4x8xf32>
    tpu.vector_store %arg10[%c0_29, %c0_30], %33 {strides = array<i32>} : memref<5x8xf32, #tpu.memory_space<vmem>>, vector<4x8xf32>,
    %cst_31 = arith.constant 0.000000e+00 : f32
    %35 = vector.broadcast %cst_31 : f32 to vector<1x8xf32>
    %c4 = arith.constant 4 : index
    %c0_32 = arith.constant 0 : index
    %36 = vector.load %arg10[%c4, %c0_32] : memref<5x8xf32, #tpu.memory_space<vmem>>, vector<1x8xf32>
    tpu.vector_store %arg10[%c4, %c0_32], %35 {strides = array<i32>} : memref<5x8xf32, #tpu.memory_space<vmem>>, vector<1x8xf32>,
    %c0_33 = arith.constant 0 : index
    %c0_34 = arith.constant 0 : index
    %37 = vector.load %arg10[%c0_33, %c0_34] : memref<5x8xf32, #tpu.memory_space<vmem>>, vector<4x8xf32>
    %c1_35 = arith.constant 1 : index
    %c0_36 = arith.constant 0 : index
    %38 = vector.load %arg10[%c1_35, %c0_36] : memref<5x8xf32, #tpu.memory_space<vmem>>, vector<4x8xf32>
    %c2 = arith.constant 2 : index
    %c0_37 = arith.constant 0 : index
    %c0_38 = arith.constant 0 : index
    %39 = vector.load %arg3[%c2, %c0_37, %c0_38] : memref<8x8x16xf32, #tpu.memory_space<vmem>>, vector<1x8x16xf32>
    %40 = vector.shape_cast %39 : vector<1x8x16xf32> to vector<8x16xf32>
    %cst_39 = arith.constant dense<0.000000e+00> : vector<4x16xf32>
    %41 = tpu.matmul %37, %40, %cst_39 {dimension_numbers = #tpu.dot_dimension_numbers<[1], [0], [0], [1], [0, 0, 1, 1], [], []>} : vector<4x8xf32>, vector<8x16xf32>, vector<4x16xf32> -> vector<4x16xf32>
    %c3 = arith.constant 3 : index
    %c0_40 = arith.constant 0 : index
    %c0_41 = arith.constant 0 : index
    %42 = vector.load %arg3[%c3, %c0_40, %c0_41] : memref<8x8x16xf32, #tpu.memory_space<vmem>>, vector<1x8x16xf32>
    %43 = vector.shape_cast %42 : vector<1x8x16xf32> to vector<8x16xf32>
    %cst_42 = arith.constant dense<0.000000e+00> : vector<4x16xf32>
    %44 = tpu.matmul %38, %43, %cst_42 {dimension_numbers = #tpu.dot_dimension_numbers<[1], [0], [0], [1], [0, 0, 1, 1], [], []>} : vector<4x8xf32>, vector<8x16xf32>, vector<4x16xf32> -> vector<4x16xf32>
    %45 = arith.addf %41, %44 : vector<4x16xf32>
    %46 = vector.extract_strided_slice %45 {offsets = [0, 0], sizes = [4, 8], strides = [1, 1]} : vector<4x16xf32> to vector<4x8xf32>
    %47 = math.tanh %46 : vector<4x8xf32>
    %48 = vector.extract_strided_slice %45 {offsets = [0, 8], sizes = [4, 8], strides = [1, 1]} : vector<4x16xf32> to vector<4x8xf32>
    %49 = arith.negf %48 : vector<4x8xf32>
    %50 = math.exp %49 : vector<4x8xf32>
    %cst_43 = arith.constant 1.000000e+00 : f32
    %51 = vector.broadcast %cst_43 : f32 to vector<4x8xf32>
    %52 = arith.addf %51, %50 : vector<4x8xf32>
    %53 = arith.divf %51, %52 : vector<4x8xf32>
    %54 = arith.mulf %47, %53 : vector<4x8xf32>
    %c1_44 = arith.constant 1 : index
    %c0_45 = arith.constant 0 : index
    %c0_46 = arith.constant 0 : index
    %55 = vector.load %arg4[%c1_44, %c0_45, %c0_46] : memref<4x8x24xf32, #tpu.memory_space<vmem>>, vector<1x8x24xf32>
    %56 = vector.shape_cast %55 : vector<1x8x24xf32> to vector<8x24xf32>
    %cst_47 = arith.constant dense<0.000000e+00> : vector<4x24xf32>
    %57 = tpu.matmul %54, %56, %cst_47 {dimension_numbers = #tpu.dot_dimension_numbers<[1], [0], [0], [1], [0, 0, 1, 1], [], []>} : vector<4x8xf32>, vector<8x24xf32>, vector<4x24xf32> -> vector<4x24xf32>
    %c0_48 = arith.constant 0 : index
    %c0_49 = arith.constant 0 : index
    %58 = vector.load %arg11[%c0_48, %c0_49] : memref<4x16xf32, #tpu.memory_space<vmem>>, vector<4x16xf32>
    %59 = vector.extract_strided_slice %57 {offsets = [0, 8], sizes = [4, 16], strides = [1, 1]} : vector<4x24xf32> to vector<4x16xf32>
    %60 = arith.addf %58, %59 : vector<4x16xf32>
    %c0_50 = arith.constant 0 : index
    %c0_51 = arith.constant 0 : index
    %61 = vector.load %arg11[%c0_50, %c0_51] : memref<4x16xf32, #tpu.memory_space<vmem>>, vector<4x16xf32>
    tpu.vector_store %arg11[%c0_50, %c0_51], %60 {strides = array<i32>} : memref<4x16xf32, #tpu.memory_space<vmem>>, vector<4x16xf32>,
    %62 = vector.extract_strided_slice %57 {offsets = [0, 0], sizes = [4, 8], strides = [1, 1]} : vector<4x24xf32> to vector<4x8xf32>
    %63 = arith.addf %62, %38 : vector<4x8xf32>
    %c0_52 = arith.constant 0 : index
    %c0_53 = arith.constant 0 : index
    %64 = vector.load %arg10[%c0_52, %c0_53] : memref<5x8xf32, #tpu.memory_space<vmem>>, vector<4x8xf32>
    tpu.vector_store %arg10[%c0_52, %c0_53], %63 {strides = array<i32>} : memref<5x8xf32, #tpu.memory_space<vmem>>, vector<4x8xf32>,
    %c0_54 = arith.constant 0 : index
    %c0_55 = arith.constant 0 : index
    %65 = vector.load %arg10[%c0_54, %c0_55] : memref<5x8xf32, #tpu.memory_space<vmem>>, vector<3x8xf32>
    %c1_56 = arith.constant 1 : index
    %c0_57 = arith.constant 0 : index
    %66 = vector.load %arg10[%c1_56, %c0_57] : memref<5x8xf32, #tpu.memory_space<vmem>>, vector<3x8xf32>
    %c4_58 = arith.constant 4 : index
    %c0_59 = arith.constant 0 : index
    %c0_60 = arith.constant 0 : index
    %67 = vector.load %arg3[%c4_58, %c0_59, %c0_60] : memref<8x8x16xf32, #tpu.memory_space<vmem>>, vector<1x8x16xf32>
    %68 = vector.shape_cast %67 : vector<1x8x16xf32> to vector<8x16xf32>
    %cst_61 = arith.constant dense<0.000000e+00> : vector<3x16xf32>
    %69 = tpu.matmul %65, %68, %cst_61 {dimension_numbers = #tpu.dot_dimension_numbers<[1], [0], [0], [1], [0, 0, 1, 1], [], []>} : vector<3x8xf32>, vector<8x16xf32>, vector<3x16xf32> -> vector<3x16xf32>
    %c5 = arith.constant 5 : index
    %c0_62 = arith.constant 0 : index
    %c0_63 = arith.constant 0 : index
    %70 = vector.load %arg3[%c5, %c0_62, %c0_63] : memref<8x8x16xf32, #tpu.memory_space<vmem>>, vector<1x8x16xf32>
    %71 = vector.shape_cast %70 : vector<1x8x16xf32> to vector<8x16xf32>
    %cst_64 = arith.constant dense<0.000000e+00> : vector<3x16xf32>
    %72 = tpu.matmul %66, %71, %cst_64 {dimension_numbers = #tpu.dot_dimension_numbers<[1], [0], [0], [1], [0, 0, 1, 1], [], []>} : vector<3x8xf32>, vector<8x16xf32>, vector<3x16xf32> -> vector<3x16xf32>
    %73 = arith.addf %69, %72 : vector<3x16xf32>
    %74 = vector.extract_strided_slice %73 {offsets = [0, 0], sizes = [3, 8], strides = [1, 1]} : vector<3x16xf32> to vector<3x8xf32>
    %75 = math.tanh %74 : vector<3x8xf32>
    %76 = vector.extract_strided_slice %73 {offsets = [0, 8], sizes = [3, 8], strides = [1, 1]} : vector<3x16xf32> to vector<3x8xf32>
    %77 = arith.negf %76 : vector<3x8xf32>
    %78 = math.exp %77 : vector<3x8xf32>
    %cst_65 = arith.constant 1.000000e+00 : f32
    %79 = vector.broadcast %cst_65 : f32 to vector<3x8xf32>
    %80 = arith.addf %79, %78 : vector<3x8xf32>
    %81 = arith.divf %79, %80 : vector<3x8xf32>
    %82 = arith.mulf %75, %81 : vector<3x8xf32>
    %c2_66 = arith.constant 2 : index
    %c0_67 = arith.constant 0 : index
    %c0_68 = arith.constant 0 : index
    %83 = vector.load %arg4[%c2_66, %c0_67, %c0_68] : memref<4x8x24xf32, #tpu.memory_space<vmem>>, vector<1x8x24xf32>
    %84 = vector.shape_cast %83 : vector<1x8x24xf32> to vector<8x24xf32>
    %cst_69 = arith.constant dense<0.000000e+00> : vector<3x24xf32>
    %85 = tpu.matmul %82, %84, %cst_69 {dimension_numbers = #tpu.dot_dimension_numbers<[1], [0], [0], [1], [0, 0, 1, 1], [], []>} : vector<3x8xf32>, vector<8x24xf32>, vector<3x24xf32> -> vector<3x24xf32>
    %c0_70 = arith.constant 0 : index
    %c0_71 = arith.constant 0 : index
    %86 = vector.load %arg11[%c0_70, %c0_71] : memref<4x16xf32, #tpu.memory_space<vmem>>, vector<3x16xf32>
    %87 = vector.extract_strided_slice %85 {offsets = [0, 8], sizes = [3, 16], strides = [1, 1]} : vector<3x24xf32> to vector<3x16xf32>
    %88 = arith.addf %86, %87 : vector<3x16xf32>
    %c0_72 = arith.constant 0 : index
    %c0_73 = arith.constant 0 : index
    %89 = vector.load %arg11[%c0_72, %c0_73] : memref<4x16xf32, #tpu.memory_space<vmem>>, vector<3x16xf32>
    tpu.vector_store %arg11[%c0_72, %c0_73], %88 {strides = array<i32>} : memref<4x16xf32, #tpu.memory_space<vmem>>, vector<3x16xf32>,
    %90 = vector.extract_strided_slice %85 {offsets = [0, 0], sizes = [3, 8], strides = [1, 1]} : vector<3x24xf32> to vector<3x8xf32>
    %91 = arith.addf %90, %66 : vector<3x8xf32>
    %c0_74 = arith.constant 0 : index
    %c0_75 = arith.constant 0 : index
    %92 = vector.load %arg10[%c0_74, %c0_75] : memref<5x8xf32, #tpu.memory_space<vmem>>, vector<3x8xf32>
    tpu.vector_store %arg10[%c0_74, %c0_75], %91 {strides = array<i32>} : memref<5x8xf32, #tpu.memory_space<vmem>>, vector<3x8xf32>,
    %c0_76 = arith.constant 0 : index
    %c0_77 = arith.constant 0 : index
    %93 = vector.load %arg10[%c0_76, %c0_77] : memref<5x8xf32, #tpu.memory_space<vmem>>, vector<2x8xf32>
    %c1_78 = arith.constant 1 : index
    %c0_79 = arith.constant 0 : index
    %94 = vector.load %arg10[%c1_78, %c0_79] : memref<5x8xf32, #tpu.memory_space<vmem>>, vector<2x8xf32>
    %c6 = arith.constant 6 : index
    %c0_80 = arith.constant 0 : index
    %c0_81 = arith.constant 0 : index
    %95 = vector.load %arg3[%c6, %c0_80, %c0_81] : memref<8x8x16xf32, #tpu.memory_space<vmem>>, vector<1x8x16xf32>
    %96 = vector.shape_cast %95 : vector<1x8x16xf32> to vector<8x16xf32>
    %cst_82 = arith.constant dense<0.000000e+00> : vector<2x16xf32>
    %97 = tpu.matmul %93, %96, %cst_82 {dimension_numbers = #tpu.dot_dimension_numbers<[1], [0], [0], [1], [0, 0, 1, 1], [], []>} : vector<2x8xf32>, vector<8x16xf32>, vector<2x16xf32> -> vector<2x16xf32>
    %c7 = arith.constant 7 : index
    %c0_83 = arith.constant 0 : index
    %c0_84 = arith.constant 0 : index
    %98 = vector.load %arg3[%c7, %c0_83, %c0_84] : memref<8x8x16xf32, #tpu.memory_space<vmem>>, vector<1x8x16xf32>
    %99 = vector.shape_cast %98 : vector<1x8x16xf32> to vector<8x16xf32>
    %cst_85 = arith.constant dense<0.000000e+00> : vector<2x16xf32>
    %100 = tpu.matmul %94, %99, %cst_85 {dimension_numbers = #tpu.dot_dimension_numbers<[1], [0], [0], [1], [0, 0, 1, 1], [], []>} : vector<2x8xf32>, vector<8x16xf32>, vector<2x16xf32> -> vector<2x16xf32>
    %101 = arith.addf %97, %100 : vector<2x16xf32>
    %102 = vector.extract_strided_slice %101 {offsets = [0, 0], sizes = [2, 8], strides = [1, 1]} : vector<2x16xf32> to vector<2x8xf32>
    %103 = math.tanh %102 : vector<2x8xf32>
    %104 = vector.extract_strided_slice %101 {offsets = [0, 8], sizes = [2, 8], strides = [1, 1]} : vector<2x16xf32> to vector<2x8xf32>
    %105 = arith.negf %104 : vector<2x8xf32>
    %106 = math.exp %105 : vector<2x8xf32>
    %cst_86 = arith.constant 1.000000e+00 : f32
    %107 = vector.broadcast %cst_86 : f32 to vector<2x8xf32>
    %108 = arith.addf %107, %106 : vector<2x8xf32>
    %109 = arith.divf %107, %108 : vector<2x8xf32>
    %110 = arith.mulf %103, %109 : vector<2x8xf32>
    %c3_87 = arith.constant 3 : index
    %c0_88 = arith.constant 0 : index
    %c0_89 = arith.constant 0 : index
    %111 = vector.load %arg4[%c3_87, %c0_88, %c0_89] : memref<4x8x24xf32, #tpu.memory_space<vmem>>, vector<1x8x24xf32>
    %112 = vector.shape_cast %111 : vector<1x8x24xf32> to vector<8x24xf32>
    %cst_90 = arith.constant dense<0.000000e+00> : vector<2x24xf32>
    %113 = tpu.matmul %110, %112, %cst_90 {dimension_numbers = #tpu.dot_dimension_numbers<[1], [0], [0], [1], [0, 0, 1, 1], [], []>} : vector<2x8xf32>, vector<8x24xf32>, vector<2x24xf32> -> vector<2x24xf32>
    %c0_91 = arith.constant 0 : index
    %c0_92 = arith.constant 0 : index
    %114 = vector.load %arg11[%c0_91, %c0_92] : memref<4x16xf32, #tpu.memory_space<vmem>>, vector<2x16xf32>
    %115 = vector.extract_strided_slice %113 {offsets = [0, 8], sizes = [2, 16], strides = [1, 1]} : vector<2x24xf32> to vector<2x16xf32>
    %116 = arith.addf %114, %115 : vector<2x16xf32>
    %c0_93 = arith.constant 0 : index
    %c0_94 = arith.constant 0 : index
    %117 = vector.load %arg11[%c0_93, %c0_94] : memref<4x16xf32, #tpu.memory_space<vmem>>, vector<2x16xf32>
    tpu.vector_store %arg11[%c0_93, %c0_94], %116 {strides = array<i32>} : memref<4x16xf32, #tpu.memory_space<vmem>>, vector<2x16xf32>,
    %c0_95 = arith.constant 0 : index
    %c0_96 = arith.constant 0 : index
    %118 = vector.load %arg11[%c0_95, %c0_96] : memref<4x16xf32, #tpu.memory_space<vmem>>, vector<4x16xf32>
    %cst_97 = arith.constant 0.000000e+00 : f32
    %119 = vector.broadcast %cst_97 : f32 to vector<4x16xf32>
    %120 = arith.maximumf %118, %119 : vector<4x16xf32>
    %c0_98 = arith.constant 0 : index
    %c0_99 = arith.constant 0 : index
    %121 = vector.load %arg5[%c0_98, %c0_99] : memref<16x16xf32, #tpu.memory_space<vmem>>, vector<16x16xf32>
    %cst_100 = arith.constant dense<0.000000e+00> : vector<4x16xf32>
    %122 = tpu.matmul %120, %121, %cst_100 {dimension_numbers = #tpu.dot_dimension_numbers<[1], [0], [0], [1], [0, 0, 1, 1], [], []>} : vector<4x16xf32>, vector<16x16xf32>, vector<4x16xf32> -> vector<4x16xf32>
    %c0_101 = arith.constant 0 : index
    %c0_102 = arith.constant 0 : index
    %123 = vector.load %arg6[%c0_101, %c0_102] : memref<1x16xf32, #tpu.memory_space<vmem>>, vector<1x16xf32>
    %124 = vector.broadcast %123 : vector<1x16xf32> to vector<4x16xf32>
    %125 = arith.addf %122, %124 : vector<4x16xf32>
    %cst_103 = arith.constant 0.000000e+00 : f32
    %126 = vector.broadcast %cst_103 : f32 to vector<4x16xf32>
    %127 = arith.maximumf %125, %126 : vector<4x16xf32>
    %c0_104 = arith.constant 0 : index
    %c0_105 = arith.constant 0 : index
    %128 = vector.load %arg7[%c0_104, %c0_105] : memref<16x16xf32, #tpu.memory_space<vmem>>, vector<16x16xf32>
    %cst_106 = arith.constant dense<0.000000e+00> : vector<4x16xf32>
    %129 = tpu.matmul %127, %128, %cst_106 {dimension_numbers = #tpu.dot_dimension_numbers<[1], [0], [0], [1], [0, 0, 1, 1], [], []>} : vector<4x16xf32>, vector<16x16xf32>, vector<4x16xf32> -> vector<4x16xf32>
    %c0_107 = arith.constant 0 : index
    %c0_108 = arith.constant 0 : index
    %130 = vector.load %arg8[%c0_107, %c0_108] : memref<1x16xf32, #tpu.memory_space<vmem>>, vector<1x16xf32>
    %131 = vector.broadcast %130 : vector<1x16xf32> to vector<4x16xf32>
    %132 = arith.addf %129, %131 : vector<4x16xf32>
    %c0_109 = arith.constant 0 : index
    %c0_110 = arith.constant 0 : index
    %c0_111 = arith.constant 0 : index
    %133 = vector.load %arg9[%c0_109, %c0_110, %c0_111] : memref<1x4x16xf32, #tpu.memory_space<vmem>>, vector<1x4x16xf32>
    %134 = vector.shape_cast %133 : vector<1x4x16xf32> to vector<4x16xf32>
    %135 = vector.shape_cast %132 : vector<4x16xf32> to vector<1x4x16xf32>
    tpu.vector_store %arg9[%c0_109, %c0_110, %c0_111], %135 {strides = array<i32>} : memref<1x4x16xf32, #tpu.memory_space<vmem>>, vector<1x4x16xf32>,
    return
  }
  func.func @transform_0(%arg0: i32) -> (i32, i32, i32) {
    %c0_i32 = arith.constant 0 : i32
    %c0_i32_0 = arith.constant 0 : i32
    %c0_i32_1 = arith.constant 0 : i32
    return %arg0, %c0_i32, %c0_i32_0 : i32, i32, i32
  }
  func.func @transform_1(%arg0: i32) -> (i32, i32) {
    %c0_i32 = arith.constant 0 : i32
    %c0_i32_0 = arith.constant 0 : i32
    %c0_i32_1 = arith.constant 0 : i32
    return %c0_i32, %c0_i32_0 : i32, i32
  }
  func.func @transform_2(%arg0: i32) -> (i32, i32, i32) {
    %c0_i32 = arith.constant 0 : i32
    %c0_i32_0 = arith.constant 0 : i32
    %c0_i32_1 = arith.constant 0 : i32
    %c0_i32_2 = arith.constant 0 : i32
    return %c0_i32, %c0_i32_0, %c0_i32_1 : i32, i32, i32
  }
  func.func @transform_3(%arg0: i32) -> (i32, i32, i32) {
    %c0_i32 = arith.constant 0 : i32
    %c0_i32_0 = arith.constant 0 : i32
    %c0_i32_1 = arith.constant 0 : i32
    %c0_i32_2 = arith.constant 0 : i32
    return %c0_i32, %c0_i32_0, %c0_i32_1 : i32, i32, i32
  }
  func.func @transform_4(%arg0: i32) -> (i32, i32) {
    %c0_i32 = arith.constant 0 : i32
    %c0_i32_0 = arith.constant 0 : i32
    %c0_i32_1 = arith.constant 0 : i32
    return %c0_i32, %c0_i32_0 : i32, i32
  }
  func.func @transform_5(%arg0: i32) -> (i32, i32) {
    %c0_i32 = arith.constant 0 : i32
    %c0_i32_0 = arith.constant 0 : i32
    %c0_i32_1 = arith.constant 0 : i32
    return %c0_i32, %c0_i32_0 : i32, i32
  }
  func.func @transform_6(%arg0: i32) -> (i32, i32) {
    %c0_i32 = arith.constant 0 : i32
    %c0_i32_0 = arith.constant 0 : i32
    %c0_i32_1 = arith.constant 0 : i32
    return %c0_i32, %c0_i32_0 : i32, i32
  }
  func.func @transform_7(%arg0: i32) -> (i32, i32) {
    %c0_i32 = arith.constant 0 : i32
    %c0_i32_0 = arith.constant 0 : i32
    %c0_i32_1 = arith.constant 0 : i32
    return %c0_i32, %c0_i32_0 : i32, i32
  }
  func.func @transform_8(%arg0: i32) -> (i32, i32, i32) {
    %c0_i32 = arith.constant 0 : i32
    %c0_i32_0 = arith.constant 0 : i32
    %c0_i32_1 = arith.constant 0 : i32
    return %arg0, %c0_i32, %c0_i32_0 : i32, i32, i32
  }
}

</mosaic_0001>

<llo_original>
// kernel: wavenet_forward.1
$region0: #{wavenet_forward.1}
  #allocation0 [shape = 'u32[]', space=smem, size = 0x4, offset = 0x4, fixed_abs, tag = 'smem constant byte address 0x4 - core index']
  #allocation1 [shape = 'u32[144,128]{1,0:T(1,128)}', space=vmem, size = 0x12000, scoped, tag = 'internal scratch']
  #allocation2 [shape = 'f32[5,8]{1,0:T(8,128)}', space=vmem, size = 0x1000, scoped, tag = 'scratch operand']
  #allocation3 [shape = 'f32[4,16]{1,0:T(4,128)}', space=vmem, size = 0x800, scoped, tag = 'scratch operand']
  %s0 = inlined_call_operand.vmem [shape: f32[2,5,16], index: 0, kind: input, shape index: {}]
  %s1 = inlined_call_operand.vmem [shape: f32[16,8], index: 1, kind: input, shape index: {}]
  %s2 = inlined_call_operand.vmem [shape: f32[8,8,16], index: 2, kind: input, shape index: {}]
  %s3 = inlined_call_operand.vmem [shape: f32[4,8,24], index: 3, kind: input, shape index: {}]
  %s4 = inlined_call_operand.vmem [shape: f32[16,16], index: 4, kind: input, shape index: {}]
  %s5 = inlined_call_operand.vmem [shape: f32[1,16], index: 5, kind: input, shape index: {}]
  %s6 = inlined_call_operand.vmem [shape: f32[16,16], index: 6, kind: input, shape index: {}]
  %s7 = inlined_call_operand.vmem [shape: f32[1,16], index: 7, kind: input, shape index: {}]
  %s8 = inlined_call_operand.hbm [shape: f32[2,4,16], index: 8, kind: output, shape index: {}]
  %s9 = sld [smem:[#allocation0]]
  $region65: #{wavenet_forward.1} parent=0
    _
  %s11 = ssub.s32 1, %s9
  %s12 = scalar_select 0, %s11, %s9
  $region1: #{wavenet_forward.1} parent=0
    #allocation4 [shape = 'u8[4096]{0}', space=vmem, size = 0x1000, scoped, tag = 'output window, operand 0']
    #allocation5 [shape = 's32[2]{0}', space=sflag, size = 0x8, scoped, tag = 'scoped memory for wavenet_forward.1']
    %13 = vsyncpa [#allocation5], 0
    %s14 = scalar_lea.sflag [#allocation5], 1
    %15 = vsyncpa %s14, 0
    loop: start=0, step=1, limit=4
    $region2: #{wavenet_forward.1} parent=1 // loop_pre_header
      _
    $region3: #{wavenet_forward.1} parent=1 // loop_header
      %s17 = sphi 0, %s21
      %p18 = scmp.ge.s32.totalorder %s17, 4
      %s27 = sphi 0, %s29
      %s30 = sphi 0, %s27
      %s31 = sphi 0, %s30
      %s47 = sphi 0, %s31
      %s51 = sphi 0, %s51
      %s53 = sphi 0, %s51
      %s54 = sphi 0, %s53
      %s68 = sphi 0, %s54
      %s72 = sphi 0, %s72
      %s74 = sphi 0, %s72
      %s75 = sphi 0, %s74
      %s89 = sphi 0, %s75
      %s93 = sphi 0, %s93
      %s95 = sphi 0, %s93
      %s96 = sphi 0, %s95
      %s110 = sphi 0, %s96
      %s114 = sphi 0, %s114
      %s116 = sphi 0, %s114
      %s117 = sphi 0, %s116
      %s131 = sphi 0, %s117
      %s135 = sphi 0, %s135
      %s137 = sphi 0, %s135
      %s138 = sphi 0, %s137
      %s152 = sphi 0, %s138
      %s156 = sphi 0, %s156
      %s158 = sphi 0, %s156
      %s159 = sphi 0, %s158
      %s173 = sphi 0, %s159
      %s177 = sphi 0, %s177
      %s179 = sphi 0, %s177
      %s180 = sphi 0, %s179
      %s194 = sphi 0, %s180
      %s200 = sphi 0, %s202
      %s203 = sphi 0, %s200
      %s204 = sphi 0, %s203
      %s220 = sphi 0, %s204
    $region4: #{wavenet_forward.1} parent=1 // loop_header_branch
      %20 = sbr.rel (%p18) target = $region8
    $region5: #{wavenet_forward.1} parent=1 // loop_body
      %s22 = ssub.s32 %s17, 1
      %s23 = ssub.s32 %s17, 2
      %s24 = sadd.s32 %s17, 1
      %s25 = ssub.s32 %s17, %s24
      %p26 = scmp.eq.s32.totalorder %s25, 0
      %s28 = sadd.s32 %s27, 1
      %s29 = scalar_select %p26, %s27, %s28
      %p32 = pneg %p26
      %p33 = scmp.eq.s32.totalorder %s17, 1
      %p34 = por %p32, %p33
      %p35 = scmp.ne.s32.totalorder %s27, %s30
      %p36 = scmp.eq.s32.totalorder %s17, 0
      %p37 = por %p35, %p36
      %p38 = scmp.ne.s32.totalorder %s27, %s30
      %p39 = scmp.eq.s32.totalorder %s22, 1
      %p40 = por %p38, %p39
      %p41 = scmp.ne.s32.totalorder %s30, %s31
      %p42 = scmp.eq.s32.totalorder %s22, 0
      %p43 = por %p41, %p42
      %p44 = scmp.ne.s32.totalorder %s30, %s31
      %p45 = scmp.eq.s32.totalorder %s23, 1
      %p46 = por %p44, %p45
      %p48 = scmp.ne.s32.totalorder %s31, %s47
      %p49 = scmp.eq.s32.totalorder %s23, 0
      %p50 = por %p48, %p49
      %s52 = sadd.s32 %s51, 1
      %p55 = scmp.eq.s32.totalorder %s17, 1
      %p56 = scmp.ne.s32.totalorder %s51, %s53
      %p57 = scmp.eq.s32.totalorder %s17, 0
      %p58 = por %p56, %p57
      %p59 = scmp.ne.s32.totalorder %s51, %s53
      %p60 = scmp.eq.s32.totalorder %s22, 1
      %p61 = por %p59, %p60
      %p62 = scmp.ne.s32.totalorder %s53, %s54
      %p63 = scmp.eq.s32.totalorder %s22, 0
      %p64 = por %p62, %p63
      %p65 = scmp.ne.s32.totalorder %s53, %s54
      %p66 = scmp.eq.s32.totalorder %s23, 1
      %p67 = por %p65, %p66
      %p69 = scmp.ne.s32.totalorder %s54, %s68
      %p70 = scmp.eq.s32.totalorder %s23, 0
      %p71 = por %p69, %p70
      %s73 = sadd.s32 %s72, 1
      %p76 = scmp.eq.s32.totalorder %s17, 1
      %p77 = scmp.ne.s32.totalorder %s72, %s74
      %p78 = scmp.eq.s32.totalorder %s17, 0
      %p79 = por %p77, %p78
      %p80 = scmp.ne.s32.totalorder %s72, %s74
      %p81 = scmp.eq.s32.totalorder %s22, 1
      %p82 = por %p80, %p81
      %p83 = scmp.ne.s32.totalorder %s74, %s75
      %p84 = scmp.eq.s32.totalorder %s22, 0
      %p85 = por %p83, %p84
      %p86 = scmp.ne.s32.totalorder %s74, %s75
      %p87 = scmp.eq.s32.totalorder %s23, 1
      %p88 = por %p86, %p87
      %p90 = scmp.ne.s32.totalorder %s75, %s89
      %p91 = scmp.eq.s32.totalorder %s23, 0
      %p92 = por %p90, %p91
      %s94 = sadd.s32 %s93, 1
      %p97 = scmp.eq.s32.totalorder %s17, 1
      %p98 = scmp.ne.s32.totalorder %s93, %s95
      %p99 = scmp.eq.s32.totalorder %s17, 0
      %p100 = por %p98, %p99
      %p101 = scmp.ne.s32.totalorder %s93, %s95
      %p102 = scmp.eq.s32.totalorder %s22, 1
      %p103 = por %p101, %p102
      %p104 = scmp.ne.s32.totalorder %s95, %s96
      %p105 = scmp.eq.s32.totalorder %s22, 0
      %p106 = por %p104, %p105
      %p107 = scmp.ne.s32.totalorder %s95, %s96
      %p108 = scmp.eq.s32.totalorder %s23, 1
      %p109 = por %p107, %p108
      %p111 = scmp.ne.s32.totalorder %s96, %s110
      %p112 = scmp.eq.s32.totalorder %s23, 0
      %p113 = por %p111, %p112
      %s115 = sadd.s32 %s114, 1
      %p118 = scmp.eq.s32.totalorder %s17, 1
      %p119 = scmp.ne.s32.totalorder %s114, %s116
      %p120 = scmp.eq.s32.totalorder %s17, 0
      %p121 = por %p119, %p120
      %p122 = scmp.ne.s32.totalorder %s114, %s116
      %p123 = scmp.eq.s32.totalorder %s22, 1
      %p124 = por %p122, %p123
      %p125 = scmp.ne.s32.totalorder %s116, %s117
      %p126 = scmp.eq.s32.totalorder %s22, 0
      %p127 = por %p125, %p126
      %p128 = scmp.ne.s32.totalorder %s116, %s117
      %p129 = scmp.eq.s32.totalorder %s23, 1
      %p130 = por %p128, %p129
      %p132 = scmp.ne.s32.totalorder %s117, %s131
      %p133 = scmp.eq.s32.totalorder %s23, 0
      %p134 = por %p132, %p133
      %s136 = sadd.s32 %s135, 1
      %p139 = scmp.eq.s32.totalorder %s17, 1
      %p140 = scmp.ne.s32.totalorder %s135, %s137
      %p141 = scmp.eq.s32.totalorder %s17, 0
      %p142 = por %p140, %p141
      %p143 = scmp.ne.s32.totalorder %s135, %s137
      %p144 = scmp.eq.s32.totalorder %s22, 1
      %p145 = por %p143, %p144
      %p146 = scmp.ne.s32.totalorder %s137, %s138
      %p147 = scmp.eq.s32.totalorder %s22, 0
      %p148 = por %p146, %p147
      %p149 = scmp.ne.s32.totalorder %s137, %s138
      %p150 = scmp.eq.s32.totalorder %s23, 1
      %p151 = por %p149, %p150
      %p153 = scmp.ne.s32.totalorder %s138, %s152
      %p154 = scmp.eq.s32.totalorder %s23, 0
      %p155 = por %p153, %p154
      %s157 = sadd.s32 %s156, 1
      %p160 = scmp.eq.s32.totalorder %s17, 1
      %p161 = scmp.ne.s32.totalorder %s156, %s158
      %p162 = scmp.eq.s32.totalorder %s17, 0
      %p163 = por %p161, %p162
      %p164 = scmp.ne.s32.totalorder %s156, %s158
      %p165 = scmp.eq.s32.totalorder %s22, 1
      %p166 = por %p164, %p165
      %p167 = scmp.ne.s32.totalorder %s158, %s159
      %p168 = scmp.eq.s32.totalorder %s22, 0
      %p169 = por %p167, %p168
      %p170 = scmp.ne.s32.totalorder %s158, %s159
      %p171 = scmp.eq.s32.totalorder %s23, 1
      %p172 = por %p170, %p171
      %p174 = scmp.ne.s32.totalorder %s159, %s173
      %p175 = scmp.eq.s32.totalorder %s23, 0
      %p176 = por %p174, %p175
      %s178 = sadd.s32 %s177, 1
      %p181 = scmp.eq.s32.totalorder %s17, 1
      %p182 = scmp.ne.s32.totalorder %s177, %s179
      %p183 = scmp.eq.s32.totalorder %s17, 0
      %p184 = por %p182, %p183
      %p185 = scmp.ne.s32.totalorder %s177, %s179
      %p186 = scmp.eq.s32.totalorder %s22, 1
      %p187 = por %p185, %p186
      %p188 = scmp.ne.s32.totalorder %s179, %s180
      %p189 = scmp.eq.s32.totalorder %s22, 0
      %p190 = por %p188, %p189
      %p191 = scmp.ne.s32.totalorder %s179, %s180
      %p192 = scmp.eq.s32.totalorder %s23, 1
      %p193 = por %p191, %p192
      %p195 = scmp.ne.s32.totalorder %s180, %s194
      %p196 = scmp.eq.s32.totalorder %s23, 0
      %p197 = por %p195, %p196
      %s198 = ssub.s32 %s17, %s24
      %p199 = scmp.eq.s32.totalorder %s198, 0
      %s201 = sadd.s32 %s200, 1
      %s202 = scalar_select %p199, %s200, %s201
      %p205 = pneg %p199
      %p206 = scmp.eq.s32.totalorder %s17, 1
      %p207 = por %p205, %p206
      %p208 = scmp.ne.s32.totalorder %s200, %s203
      %p209 = scmp.eq.s32.totalorder %s17, 0
      %p210 = por %p208, %p209
      %p211 = scmp.ne.s32.totalorder %s200, %s203
      %p212 = scmp.eq.s32.totalorder %s22, 1
      %p213 = por %p211, %p212
      %p214 = scmp.ne.s32.totalorder %s203, %s204
      %p215 = scmp.eq.s32.totalorder %s22, 0
      %p216 = por %p214, %p215
      %p217 = scmp.ne.s32.totalorder %s203, %s204
      %p218 = scmp.eq.s32.totalorder %s23, 1
      %p219 = por %p217, %p218
      %p221 = scmp.ne.s32.totalorder %s204, %s220
      %p222 = scmp.eq.s32.totalorder %s23, 0
      %p223 = por %p221, %p222
      %p224 = scmp.le.s32.totalorder 1, %s17
      %p225 = scmp.lt.s32.totalorder %s17, 3
      %p226 = pnand %p224, %p225
      %p227 = pneg %p226
      // Predicated region
      $region9: #{wavenet_forward.1} parent=5 // pred_check
        _
      $region10: #{wavenet_forward.1} parent=5 // pred_check_branch
        %229 = sbr.rel (%p226) target = $region12
      $region11: #{wavenet_forward.1} parent=5 // pred_region
        %s230 = ssub.s32 %s17, 1
        // Predicated region
        $region13: #{wavenet_forward.1} parent=11 // pred_check
          %p231 = pneg %p64
        $region14: #{wavenet_forward.1} parent=11 // pred_check_branch
          %233 = sbr.rel (%p231) target = $region16
        $region15: #{wavenet_forward.1} parent=11 // pred_region
          _
        $region16: #{wavenet_forward.1} parent=11 // pred_fallthru
          _
        // Predicated region
        $region17: #{wavenet_forward.1} parent=11 // pred_check
          %p234 = pneg %p85
        $region18: #{wavenet_forward.1} parent=11 // pred_check_branch
          %236 = sbr.rel (%p234) target = $region20
        $region19: #{wavenet_forward.1} parent=11 // pred_region
          _
        $region20: #{wavenet_forward.1} parent=11 // pred_fallthru
          _
        // Predicated region
        $region21: #{wavenet_forward.1} parent=11 // pred_check
          %p237 = pneg %p106
        $region22: #{wavenet_forward.1} parent=11 // pred_check_branch
          %239 = sbr.rel (%p237) target = $region24
        $region23: #{wavenet_forward.1} parent=11 // pred_region
          _
        $region24: #{wavenet_forward.1} parent=11 // pred_fallthru
          _
        // Predicated region
        $region25: #{wavenet_forward.1} parent=11 // pred_check
          %p240 = pneg %p127
        $region26: #{wavenet_forward.1} parent=11 // pred_check_branch
          %242 = sbr.rel (%p240) target = $region28
        $region27: #{wavenet_forward.1} parent=11 // pred_region
          _
        $region28: #{wavenet_forward.1} parent=11 // pred_fallthru
          _
        // Predicated region
        $region29: #{wavenet_forward.1} parent=11 // pred_check
          %p243 = pneg %p148
        $region30: #{wavenet_forward.1} parent=11 // pred_check_branch
          %245 = sbr.rel (%p243) target = $region32
        $region31: #{wavenet_forward.1} parent=11 // pred_region
          _
        $region32: #{wavenet_forward.1} parent=11 // pred_fallthru
          _
        // Predicated region
        $region33: #{wavenet_forward.1} parent=11 // pred_check
          %p246 = pneg %p169
        $region34: #{wavenet_forward.1} parent=11 // pred_check_branch
          %248 = sbr.rel (%p246) target = $region36
        $region35: #{wavenet_forward.1} parent=11 // pred_region
          _
        $region36: #{wavenet_forward.1} parent=11 // pred_fallthru
          _
        // Predicated region
        $region37: #{wavenet_forward.1} parent=11 // pred_check
          %p249 = pneg %p190
        $region38: #{wavenet_forward.1} parent=11 // pred_check_branch
          %251 = sbr.rel (%p249) target = $region40
        $region39: #{wavenet_forward.1} parent=11 // pred_region
          _
        $region40: #{wavenet_forward.1} parent=11 // pred_fallthru
          _
      $region12: #{wavenet_forward.1} parent=5 // pred_fallthru
        _
      %p252 = scmp.lt.s32.totalorder %s17, 2
      // Predicated region
      $region41: #{wavenet_forward.1} parent=5 // pred_check
        %p253 = pneg %p252
      $region42: #{wavenet_forward.1} parent=5 // pred_check_branch
        %255 = sbr.rel (%p253) target = $region44
      $region43: #{wavenet_forward.1} parent=5 // pred_region
        // Predicated region
        $region45: #{wavenet_forward.1} parent=43 // pred_check
          %p256 = pneg %p37
        $region46: #{wavenet_forward.1} parent=43 // pred_check_branch
          %258 = sbr.rel (%p256) target = $region48
        $region47: #{wavenet_forward.1} parent=43 // pred_region
          %p259 = scmp.lt.s32.totalorder %s17, 1
          %s260 = scalar_select %p259, %s17, 1
          %s261 = smul.addr %s260, 8
          %s262 = scalar_lea.vmem %s0, %s261
        $region48: #{wavenet_forward.1} parent=43 // pred_fallthru
          _
      $region44: #{wavenet_forward.1} parent=5 // pred_fallthru
        _
      %p263 = scmp.le.s32.totalorder 1, %s17
      %p264 = scmp.lt.s32.totalorder %s17, 3
      %p265 = pnand %p263, %p264
      %p266 = pneg %p265
      // Predicated region
      $region49: #{wavenet_forward.1} parent=5 // pred_check
        _
      $region50: #{wavenet_forward.1} parent=5 // pred_check_branch
        %268 = sbr.rel (%p265) target = $region52
      $region51: #{wavenet_forward.1} parent=5 // pred_region
        %s269 = ssub.s32 %s17, 1
        %p270 = scmp.lt.s32.totalorder %s22, 1
        %s271 = scalar_select %p270, %s22, 1
        %s272 = smul.addr %s271, 8
        %s273 = scalar_lea.vmem %s0, %s272
        %p274 = pneg %p43
        %p275 = pneg %p40
        %p276 = pneg %p64
        %p277 = pneg %p61
        %p278 = pneg %p85
        %p279 = pneg %p82
        %p280 = pneg %p106
        %p281 = pneg %p103
        %p282 = pneg %p127
        %p283 = pneg %p124
        %p284 = pneg %p148
        %p285 = pneg %p145
        %p286 = pneg %p169
        %p287 = pneg %p166
        %p288 = pneg %p190
        %p289 = pneg %p187
        %p290 = pneg %p216
        %p291 = pneg %p213
        %s292 = sand.u32 %s203, 1
        %s293 = scalar_lea.sflag [#allocation5], %s292
        %s294 = sand.u32 %s203, 1
        %s295 = smul.addr %s294, 4
        %s296 = scalar_lea.vmem [#allocation4], %s295
        %p297 = scmp.lt.s32.totalorder %s22, 1
        %s298 = scalar_select %p297, %s22, 1
        %s299 = smul.addr %s298, 8
        %s300 = scalar_lea.vmem %s0, %s299
        %vm301 = vcmask 125952
        %302 = vst.msk [vmem:[#allocation3] sm:$0xf] %vm301, 0.0
        %v303 = vld [vmem:[%s300] sm:$0x1f]
        %v304 = vld [vmem:[%s1] sm:$0xff]
        %v305 = vld [vmem:[%s1 + $0x8] sm:$0xff]
        %vm306 = vcmask 130048
        %v308 = vsel %vm306, %v303, 0
        %310 = vmatprep.subr.mxu0 0.0
        %311 = vmatpush1.msra.mxu0 0.0
        %312 = vmatprep.subr.mxu0 0.0
        %313 = vmatpush1.msra.mxu0 0.0
        %314 = vmatprep.subr.mxu0 0.0
        %315 = vmatpush1.msra.mxu0 0.0
        %316 = vmatprep.subr.mxu0 0.0
        %317 = vmatpush1.msra.mxu0 0.0
        %318 = vmatprep.subr.mxu0 0.0
        %319 = vmatpush1.msra.mxu0 0.0
        %320 = vmatprep.subr.mxu0 0.0
        %321 = vmatpush1.msra.mxu0 0.0
        %322 = vmatprep.subr.mxu0 0.0
        %323 = vmatpush1.msra.mxu0 0.0
        %324 = vmatprep.subr.mxu0 0.0
        %325 = vmatpush1.msra.mxu0 0.0
        %326 = vmatprep.subr.mxu0 0.0
        %327 = vmatpush1.msra.mxu0 0.0
        %328 = vmatprep.subr.mxu0 0.0
        %329 = vmatpush1.msra.mxu0 0.0
        %330 = vmatprep.subr.mxu0 0.0
        %331 = vmatpush1.msra.mxu0 0.0
        %332 = vmatprep.subr.mxu0 0.0
        %333 = vmatpush1.msra.mxu0 0.0
        %334 = vmatprep.subr.mxu0 0.0
        %335 = vmatpush1.msra.mxu0 0.0
        %336 = vmatprep.subr.mxu0 0.0
        %337 = vmatpush1.msra.mxu0 0.0
        %338 = vmatprep.subr.mxu0 0.0
        %339 = vmatpush1.msra.mxu0 %v305
        %340 = vmatprep.subr.mxu0 0.0
        %341 = vmatpush1.msra.mxu0 %v304
        %342 = vmatprep.subr.mxu0 0.0
        %343 = vmatpush2.msra.mxu0 0.0
        %344 = vmatprep.subr.mxu0 0.0
        %345 = vmatpush2.msra.mxu0 0.0
        %346 = vmatprep.subr.mxu0 0.0
        %347 = vmatpush2.msra.mxu0 0.0
        %348 = vmatprep.subr.mxu0 0.0
        %349 = vmatpush2.msra.mxu0 0.0
        %350 = vmatprep.subr.mxu0 0.0
        %351 = vmatpush2.msra.mxu0 0.0
        %352 = vmatprep.subr.mxu0 0.0
        %353 = vmatpush2.msra.mxu0 0.0
        %354 = vmatprep.subr.mxu0 0.0
        %355 = vmatpush2.msra.mxu0 0.0
        %356 = vmatprep.subr.mxu0 0.0
        %357 = vmatpush2.msra.mxu0 0.0
        %358 = vmatprep.subr.mxu0 0.0
        %359 = vmatpush2.msra.mxu0 0.0
        %360 = vmatprep.subr.mxu0 0.0
        %361 = vmatpush2.msra.mxu0 0.0
        %362 = vmatprep.subr.mxu0 0.0
        %363 = vmatpush2.msra.mxu0 0.0
        %364 = vmatprep.subr.mxu0 0.0
        %365 = vmatpush2.msra.mxu0 0.0
        %366 = vmatprep.subr.mxu0 0.0
        %367 = vmatpush2.msra.mxu0 0.0
        %368 = vmatprep.subr.mxu0 0.0
        %369 = vmatpush2.msra.mxu0 0.0
        %370 = vmatprep.subr.mxu0 0.0
        %371 = vmatpush2.msra.mxu0 0.0
        %372 = vmatprep.subr.mxu0 0.0
        %373 = vmatpush2.msra.mxu0 0.0
        %374 = vmatprep.mubr.f32.mxu0 0.0
        %375 = vmatmul.mubr.f32.gmra.mxu0 %v308
        %v376 = vpop.f32.mrf.mxu0
        %v377 = vadd.f32 0.0, %v376
        %v378 = vpop.f32.mrf.mxu0
        %379 = vdwg.mxu0
        %vm380 = vcmask 61440
        %381 = vst.msk [vmem:[#allocation2] sm:$0x1f] %vm380, %v377
        %v382 = vld [vmem:[#allocation2] sm:$0xf]
        %v383 = vld [vmem:[#allocation2 + $0x1] sm:$0xf]
        %v384 = vld [vmem:[%s2] sm:$0xff]
        %s385 = scalar_lea.vmem %s2, 8
        %v386 = vld [vmem:[%s385] sm:$0xff]
        %vm387 = vcmask 64512
        %v389 = vsel %vm387, %v383, 0
        %391 = vmatprep.subr.mxu0 0.0
        %392 = vmatpush1.msra.mxu0 0.0
        %393 = vmatprep.subr.mxu0 0.0
        %394 = vmatpush1.msra.mxu0 0.0
        %395 = vmatprep.subr.mxu0 0.0
        %396 = vmatpush1.msra.mxu0 0.0
        %397 = vmatprep.subr.mxu0 0.0
        %398 = vmatpush1.msra.mxu0 0.0
        %399 = vmatprep.subr.mxu0 0.0
        %400 = vmatpush1.msra.mxu0 0.0
        %401 = vmatprep.subr.mxu0 0.0
        %402 = vmatpush1.msra.mxu0 0.0
        %403 = vmatprep.subr.mxu0 0.0
        %404 = vmatpush1.msra.mxu0 0.0
        %405 = vmatprep.subr.mxu0 0.0
        %406 = vmatpush1.msra.mxu0 0.0
        %407 = vmatprep.subr.mxu0 0.0
        %408 = vmatpush1.msra.mxu0 0.0
        %409 = vmatprep.subr.mxu0 0.0
        %410 = vmatpush1.msra.mxu0 0.0
        %411 = vmatprep.subr.mxu0 0.0
        %412 = vmatpush1.msra.mxu0 0.0
        %413 = vmatprep.subr.mxu0 0.0
        %414 = vmatpush1.msra.mxu0 0.0
        %415 = vmatprep.subr.mxu0 0.0
        %416 = vmatpush1.msra.mxu0 0.0
        %417 = vmatprep.subr.mxu0 0.0
        %418 = vmatpush1.msra.mxu0 0.0
        %419 = vmatprep.subr.mxu0 0.0
        %420 = vmatpush1.msra.mxu0 0.0
        %421 = vmatprep.subr.mxu0 0.0
        %422 = vmatpush1.msra.mxu0 %v386
        %423 = vmatprep.subr.mxu0 0.0
        %424 = vmatpush2.msra.mxu0 0.0
        %425 = vmatprep.subr.mxu0 0.0
        %426 = vmatpush2.msra.mxu0 0.0
        %427 = vmatprep.subr.mxu0 0.0
        %428 = vmatpush2.msra.mxu0 0.0
        %429 = vmatprep.subr.mxu0 0.0
        %430 = vmatpush2.msra.mxu0 0.0
        %431 = vmatprep.subr.mxu0 0.0
        %432 = vmatpush2.msra.mxu0 0.0
        %433 = vmatprep.subr.mxu0 0.0
        %434 = vmatpush2.msra.mxu0 0.0
        %435 = vmatprep.subr.mxu0 0.0
        %436 = vmatpush2.msra.mxu0 0.0
        %437 = vmatprep.subr.mxu0 0.0
        %438 = vmatpush2.msra.mxu0 0.0
        %439 = vmatprep.subr.mxu0 0.0
        %440 = vmatpush2.msra.mxu0 0.0
        %441 = vmatprep.subr.mxu0 0.0
        %442 = vmatpush2.msra.mxu0 0.0
        %443 = vmatprep.subr.mxu0 0.0
        %444 = vmatpush2.msra.mxu0 0.0
        %445 = vmatprep.subr.mxu0 0.0
        %446 = vmatpush2.msra.mxu0 0.0
        %447 = vmatprep.subr.mxu0 0.0
        %448 = vmatpush2.msra.mxu0 0.0
        %449 = vmatprep.subr.mxu0 0.0
        %450 = vmatpush2.msra.mxu0 0.0
        %451 = vmatprep.subr.mxu0 0.0
        %452 = vmatpush2.msra.mxu0 0.0
        %453 = vmatprep.subr.mxu0 0.0
        %454 = vmatpush2.msra.mxu0 0.0
        %455 = vmatprep.mubr.f32.mxu0 0.0
        %456 = vmatmul.mubr.f32.gmra.mxu0 %v389
        %v457 = vpop.f32.mrf.mxu0
        %v458 = vadd.f32 0.0, %v457
        %v459 = vpop.f32.mrf.mxu0
        %460 = vdwg.mxu0
        %v462 = vsel %vm387, %v382, 0
        %464 = vmatprep.subr.mxu0 0.0
        %465 = vmatpush1.msra.mxu0 0.0
        %466 = vmatprep.subr.mxu0 0.0
        %467 = vmatpush1.msra.mxu0 0.0
        %468 = vmatprep.subr.mxu0 0.0
        %469 = vmatpush1.msra.mxu0 0.0
        %470 = vmatprep.subr.mxu0 0.0
        %471 = vmatpush1.msra.mxu0 0.0
        %472 = vmatprep.subr.mxu0 0.0
        %473 = vmatpush1.msra.mxu0 0.0
        %474 = vmatprep.subr.mxu0 0.0
        %475 = vmatpush1.msra.mxu0 0.0
        %476 = vmatprep.subr.mxu0 0.0
        %477 = vmatpush1.msra.mxu0 0.0
        %478 = vmatprep.subr.mxu0 0.0
        %479 = vmatpush1.msra.mxu0 0.0
        %480 = vmatprep.subr.mxu0 0.0
        %481 = vmatpush1.msra.mxu0 0.0
        %482 = vmatprep.subr.mxu0 0.0
        %483 = vmatpush1.msra.mxu0 0.0
        %484 = vmatprep.subr.mxu0 0.0
        %485 = vmatpush1.msra.mxu0 0.0
        %486 = vmatprep.subr.mxu0 0.0
        %487 = vmatpush1.msra.mxu0 0.0
        %488 = vmatprep.subr.mxu0 0.0
        %489 = vmatpush1.msra.mxu0 0.0
        %490 = vmatprep.subr.mxu0 0.0
        %491 = vmatpush1.msra.mxu0 0.0
        %492 = vmatprep.subr.mxu0 0.0
        %493 = vmatpush1.msra.mxu0 0.0
        %494 = vmatprep.subr.mxu0 0.0
        %495 = vmatpush1.msra.mxu0 %v384
        %496 = vmatprep.subr.mxu0 0.0
        %497 = vmatpush2.msra.mxu0 0.0
        %498 = vmatprep.subr.mxu0 0.0
        %499 = vmatpush2.msra.mxu0 0.0
        %500 = vmatprep.subr.mxu0 0.0
        %501 = vmatpush2.msra.mxu0 0.0
        %502 = vmatprep.subr.mxu0 0.0
        %503 = vmatpush2.msra.mxu0 0.0
        %504 = vmatprep.subr.mxu0 0.0
        %505 = vmatpush2.msra.mxu0 0.0
        %506 = vmatprep.subr.mxu0 0.0
        %507 = vmatpush2.msra.mxu0 0.0
        %508 = vmatprep.subr.mxu0 0.0
        %509 = vmatpush2.msra.mxu0 0.0
        %510 = vmatprep.subr.mxu0 0.0
        %511 = vmatpush2.msra.mxu0 0.0
        %512 = vmatprep.subr.mxu0 0.0
        %513 = vmatpush2.msra.mxu0 0.0
        %514 = vmatprep.subr.mxu0 0.0
        %515 = vmatpush2.msra.mxu0 0.0
        %516 = vmatprep.subr.mxu0 0.0
        %517 = vmatpush2.msra.mxu0 0.0
        %518 = vmatprep.subr.mxu0 0.0
        %519 = vmatpush2.msra.mxu0 0.0
        %520 = vmatprep.subr.mxu0 0.0
        %521 = vmatpush2.msra.mxu0 0.0
        %522 = vmatprep.subr.mxu0 0.0
        %523 = vmatpush2.msra.mxu0 0.0
        %524 = vmatprep.subr.mxu0 0.0
        %525 = vmatpush2.msra.mxu0 0.0
        %526 = vmatprep.subr.mxu0 0.0
        %527 = vmatpush2.msra.mxu0 0.0
        %528 = vmatprep.mubr.f32.mxu0 0.0
        %529 = vmatmul.mubr.f32.gmra.mxu0 %v462
        %v530 = vpop.f32.mrf.mxu0
        %v531 = vadd.f32 %v458, %v530
        %v532 = vpop.f32.mrf.mxu0
        %533 = vdwg.mxu0
        %v534 = vtanh.pop %v531
        %v535 = vxor.u32 %v531, 2147483648
        %v536 = vmul.f32 %v535, 1.442695
        %v537 = vpow.pop %v536
        %v538 = vadd.f32 %v537, 1.0
        %v539 = vrcp.pop %v538
        %v540 = vmul.f32 1.0, %v539
        %542 = vrot.lane.b32.xlu0 %v540, 120
        %v543 = vpop.permute.xlu0 %542
        %v545 = vmul.f32 %v534, %v543
        %v546 = vld [vmem:[%s3] sm:$0xff]
        %v548 = vsel %vm387, %v545, 0
        %550 = vmatprep.subr.mxu0 0.0
        %551 = vmatpush1.msra.mxu0 0.0
        %552 = vmatprep.subr.mxu0 0.0
        %553 = vmatpush1.msra.mxu0 0.0
        %554 = vmatprep.subr.mxu0 0.0
        %555 = vmatpush1.msra.mxu0 0.0
        %556 = vmatprep.subr.mxu0 0.0
        %557 = vmatpush1.msra.mxu0 0.0
        %558 = vmatprep.subr.mxu0 0.0
        %559 = vmatpush1.msra.mxu0 0.0
        %560 = vmatprep.subr.mxu0 0.0
        %561 = vmatpush1.msra.mxu0 0.0
        %562 = vmatprep.subr.mxu0 0.0
        %563 = vmatpush1.msra.mxu0 0.0
        %564 = vmatprep.subr.mxu0 0.0
        %565 = vmatpush1.msra.mxu0 0.0
        %566 = vmatprep.subr.mxu0 0.0
        %567 = vmatpush1.msra.mxu0 0.0
        %568 = vmatprep.subr.mxu0 0.0
        %569 = vmatpush1.msra.mxu0 0.0
        %570 = vmatprep.subr.mxu0 0.0
        %571 = vmatpush1.msra.mxu0 0.0
        %572 = vmatprep.subr.mxu0 0.0
        %573 = vmatpush1.msra.mxu0 0.0
        %574 = vmatprep.subr.mxu0 0.0
        %575 = vmatpush1.msra.mxu0 0.0
        %576 = vmatprep.subr.mxu0 0.0
        %577 = vmatpush1.msra.mxu0 0.0
        %578 = vmatprep.subr.mxu0 0.0
        %579 = vmatpush1.msra.mxu0 0.0
        %580 = vmatprep.subr.mxu0 0.0
        %581 = vmatpush1.msra.mxu0 %v546
        %582 = vmatprep.subr.mxu0 0.0
        %583 = vmatpush2.msra.mxu0 0.0
        %584 = vmatprep.subr.mxu0 0.0
        %585 = vmatpush2.msra.mxu0 0.0
        %586 = vmatprep.subr.mxu0 0.0
        %587 = vmatpush2.msra.mxu0 0.0
        %588 = vmatprep.subr.mxu0 0.0
        %589 = vmatpush2.msra.mxu0 0.0
        %590 = vmatprep.subr.mxu0 0.0
        %591 = vmatpush2.msra.mxu0 0.0
        %592 = vmatprep.subr.mxu0 0.0
        %593 = vmatpush2.msra.mxu0 0.0
        %594 = vmatprep.subr.mxu0 0.0
        %595 = vmatpush2.msra.mxu0 0.0
        %596 = vmatprep.subr.mxu0 0.0
        %597 = vmatpush2.msra.mxu0 0.0
        %598 = vmatprep.subr.mxu0 0.0
        %599 = vmatpush2.msra.mxu0 0.0
        %600 = vmatprep.subr.mxu0 0.0
        %601 = vmatpush2.msra.mxu0 0.0
        %602 = vmatprep.subr.mxu0 0.0
        %603 = vmatpush2.msra.mxu0 0.0
        %604 = vmatprep.subr.mxu0 0.0
        %605 = vmatpush2.msra.mxu0 0.0
        %606 = vmatprep.subr.mxu0 0.0
        %607 = vmatpush2.msra.mxu0 0.0
        %608 = vmatprep.subr.mxu0 0.0
        %609 = vmatpush2.msra.mxu0 0.0
        %610 = vmatprep.subr.mxu0 0.0
        %611 = vmatpush2.msra.mxu0 0.0
        %612 = vmatprep.subr.mxu0 0.0
        %613 = vmatpush2.msra.mxu0 0.0
        %614 = vmatprep.mubr.f32.mxu0 0.0
        %615 = vmatmul.mubr.f32.gmra.mxu0 %v548
        %v616 = vpop.f32.mrf.mxu0
        %v617 = vadd.f32 0.0, %v616
        %v618 = vpop.f32.mrf.mxu0
        %619 = vdwg.mxu0
        %v620 = vld [vmem:[#allocation3] sm:$0xf]
        %622 = vrot.lane.b32.xlu0 %v617, 120
        %v623 = vpop.permute.xlu0 %622
        %v625 = vadd.f32 %v620, %v623
        %626 = vst.msk [vmem:[#allocation3] sm:$0xf] %vm301, %v625
        %v627 = vadd.f32 %v617, %v383
        %vm628 = vcmask 60416
        %629 = vst.msk [vmem:[#allocation2] sm:$0xf] %vm628, %v627
        %vm630 = vcmask 57344
        %631 = vst.msk [vmem:[#allocation2 + $0x4] sm:$0x1] %vm630, 0.0
        %v632 = vld [vmem:[#allocation2] sm:$0xf]
        %v633 = vld [vmem:[#allocation2 + $0x1] sm:$0xf]
        %s634 = scalar_lea.vmem %s2, 16
        %v635 = vld [vmem:[%s634] sm:$0xff]
        %s636 = scalar_lea.vmem %s2, 24
        %v637 = vld [vmem:[%s636] sm:$0xff]
        %v639 = vsel %vm387, %v633, 0
        %641 = vmatprep.subr.mxu0 0.0
        %642 = vmatpush1.msra.mxu0 0.0
        %643 = vmatprep.subr.mxu0 0.0
        %644 = vmatpush1.msra.mxu0 0.0
        %645 = vmatprep.subr.mxu0 0.0
        %646 = vmatpush1.msra.mxu0 0.0
        %647 = vmatprep.subr.mxu0 0.0
        %648 = vmatpush1.msra.mxu0 0.0
        %649 = vmatprep.subr.mxu0 0.0
        %650 = vmatpush1.msra.mxu0 0.0
        %651 = vmatprep.subr.mxu0 0.0
        %652 = vmatpush1.msra.mxu0 0.0
        %653 = vmatprep.subr.mxu0 0.0
        %654 = vmatpush1.msra.mxu0 0.0
        %655 = vmatprep.subr.mxu0 0.0
        %656 = vmatpush1.msra.mxu0 0.0
        %657 = vmatprep.subr.mxu0 0.0
        %658 = vmatpush1.msra.mxu0 0.0
        %659 = vmatprep.subr.mxu0 0.0
        %660 = vmatpush1.msra.mxu0 0.0
        %661 = vmatprep.subr.mxu0 0.0
        %662 = vmatpush1.msra.mxu0 0.0
        %663 = vmatprep.subr.mxu0 0.0
        %664 = vmatpush1.msra.mxu0 0.0
        %665 = vmatprep.subr.mxu0 0.0
        %666 = vmatpush1.msra.mxu0 0.0
        %667 = vmatprep.subr.mxu0 0.0
        %668 = vmatpush1.msra.mxu0 0.0
        %669 = vmatprep.subr.mxu0 0.0
        %670 = vmatpush1.msra.mxu0 0.0
        %671 = vmatprep.subr.mxu0 0.0
        %672 = vmatpush1.msra.mxu0 %v637
        %673 = vmatprep.subr.mxu0 0.0
        %674 = vmatpush2.msra.mxu0 0.0
        %675 = vmatprep.subr.mxu0 0.0
        %676 = vmatpush2.msra.mxu0 0.0
        %677 = vmatprep.subr.mxu0 0.0
        %678 = vmatpush2.msra.mxu0 0.0
        %679 = vmatprep.subr.mxu0 0.0
        %680 = vmatpush2.msra.mxu0 0.0
        %681 = vmatprep.subr.mxu0 0.0
        %682 = vmatpush2.msra.mxu0 0.0
        %683 = vmatprep.subr.mxu0 0.0
        %684 = vmatpush2.msra.mxu0 0.0
        %685 = vmatprep.subr.mxu0 0.0
        %686 = vmatpush2.msra.mxu0 0.0
        %687 = vmatprep.subr.mxu0 0.0
        %688 = vmatpush2.msra.mxu0 0.0
        %689 = vmatprep.subr.mxu0 0.0
        %690 = vmatpush2.msra.mxu0 0.0
        %691 = vmatprep.subr.mxu0 0.0
        %692 = vmatpush2.msra.mxu0 0.0
        %693 = vmatprep.subr.mxu0 0.0
        %694 = vmatpush2.msra.mxu0 0.0
        %695 = vmatprep.subr.mxu0 0.0
        %696 = vmatpush2.msra.mxu0 0.0
        %697 = vmatprep.subr.mxu0 0.0
        %698 = vmatpush2.msra.mxu0 0.0
        %699 = vmatprep.subr.mxu0 0.0
        %700 = vmatpush2.msra.mxu0 0.0
        %701 = vmatprep.subr.mxu0 0.0
        %702 = vmatpush2.msra.mxu0 0.0
        %703 = vmatprep.subr.mxu0 0.0
        %704 = vmatpush2.msra.mxu0 0.0
        %705 = vmatprep.mubr.f32.mxu0 0.0
        %706 = vmatmul.mubr.f32.gmra.mxu0 %v639
        %v707 = vpop.f32.mrf.mxu0
        %v708 = vadd.f32 0.0, %v707
        %v709 = vpop.f32.mrf.mxu0
        %710 = vdwg.mxu0
        %v712 = vsel %vm387, %v632, 0
        %714 = vmatprep.subr.mxu0 0.0
        %715 = vmatpush1.msra.mxu0 0.0
        %716 = vmatprep.subr.mxu0 0.0
        %717 = vmatpush1.msra.mxu0 0.0
        %718 = vmatprep.subr.mxu0 0.0
        %719 = vmatpush1.msra.mxu0 0.0
        %720 = vmatprep.subr.mxu0 0.0
        %721 = vmatpush1.msra.mxu0 0.0
        %722 = vmatprep.subr.mxu0 0.0
        %723 = vmatpush1.msra.mxu0 0.0
        %724 = vmatprep.subr.mxu0 0.0
        %725 = vmatpush1.msra.mxu0 0.0
        %726 = vmatprep.subr.mxu0 0.0
        %727 = vmatpush1.msra.mxu0 0.0
        %728 = vmatprep.subr.mxu0 0.0
        %729 = vmatpush1.msra.mxu0 0.0
        %730 = vmatprep.subr.mxu0 0.0
        %731 = vmatpush1.msra.mxu0 0.0
        %732 = vmatprep.subr.mxu0 0.0
        %733 = vmatpush1.msra.mxu0 0.0
        %734 = vmatprep.subr.mxu0 0.0
        %735 = vmatpush1.msra.mxu0 0.0
        %736 = vmatprep.subr.mxu0 0.0
        %737 = vmatpush1.msra.mxu0 0.0
        %738 = vmatprep.subr.mxu0 0.0
        %739 = vmatpush1.msra.mxu0 0.0
        %740 = vmatprep.subr.mxu0 0.0
        %741 = vmatpush1.msra.mxu0 0.0
        %742 = vmatprep.subr.mxu0 0.0
        %743 = vmatpush1.msra.mxu0 0.0
        %744 = vmatprep.subr.mxu0 0.0
        %745 = vmatpush1.msra.mxu0 %v635
        %746 = vmatprep.subr.mxu0 0.0
        %747 = vmatpush2.msra.mxu0 0.0
        %748 = vmatprep.subr.mxu0 0.0
        %749 = vmatpush2.msra.mxu0 0.0
        %750 = vmatprep.subr.mxu0 0.0
        %751 = vmatpush2.msra.mxu0 0.0
        %752 = vmatprep.subr.mxu0 0.0
        %753 = vmatpush2.msra.mxu0 0.0
        %754 = vmatprep.subr.mxu0 0.0
        %755 = vmatpush2.msra.mxu0 0.0
        %756 = vmatprep.subr.mxu0 0.0
        %757 = vmatpush2.msra.mxu0 0.0
        %758 = vmatprep.subr.mxu0 0.0
        %759 = vmatpush2.msra.mxu0 0.0
        %760 = vmatprep.subr.mxu0 0.0
        %761 = vmatpush2.msra.mxu0 0.0
        %762 = vmatprep.subr.mxu0 0.0
        %763 = vmatpush2.msra.mxu0 0.0
        %764 = vmatprep.subr.mxu0 0.0
        %765 = vmatpush2.msra.mxu0 0.0
        %766 = vmatprep.subr.mxu0 0.0
        %767 = vmatpush2.msra.mxu0 0.0
        %768 = vmatprep.subr.mxu0 0.0
        %769 = vmatpush2.msra.mxu0 0.0
        %770 = vmatprep.subr.mxu0 0.0
        %771 = vmatpush2.msra.mxu0 0.0
        %772 = vmatprep.subr.mxu0 0.0
        %773 = vmatpush2.msra.mxu0 0.0
        %774 = vmatprep.subr.mxu0 0.0
        %775 = vmatpush2.msra.mxu0 0.0
        %776 = vmatprep.subr.mxu0 0.0
        %777 = vmatpush2.msra.mxu0 0.0
        %778 = vmatprep.mubr.f32.mxu0 0.0
        %779 = vmatmul.mubr.f32.gmra.mxu0 %v712
        %v780 = vpop.f32.mrf.mxu0
        %v781 = vadd.f32 %v708, %v780
        %v782 = vpop.f32.mrf.mxu0
        %783 = vdwg.mxu0
        %v784 = vtanh.pop %v781
        %v785 = vxor.u32 %v781, 2147483648
        %v786 = vmul.f32 %v785, 1.442695
        %v787 = vpow.pop %v786
        %v788 = vadd.f32 %v787, 1.0
        %v789 = vrcp.pop %v788
        %v790 = vmul.f32 1.0, %v789
        %792 = vrot.lane.b32.xlu0 %v790, 120
        %v793 = vpop.permute.xlu0 %792
        %v795 = vmul.f32 %v784, %v793
        %s796 = scalar_lea.vmem %s3, 8
        %v797 = vld [vmem:[%s796] sm:$0xff]
        %v799 = vsel %vm387, %v795, 0
        %801 = vmatprep.subr.mxu0 0.0
        %802 = vmatpush1.msra.mxu0 0.0
        %803 = vmatprep.subr.mxu0 0.0
        %804 = vmatpush1.msra.mxu0 0.0
        %805 = vmatprep.subr.mxu0 0.0
        %806 = vmatpush1.msra.mxu0 0.0
        %807 = vmatprep.subr.mxu0 0.0
        %808 = vmatpush1.msra.mxu0 0.0
        %809 = vmatprep.subr.mxu0 0.0
        %810 = vmatpush1.msra.mxu0 0.0
        %811 = vmatprep.subr.mxu0 0.0
        %812 = vmatpush1.msra.mxu0 0.0
        %813 = vmatprep.subr.mxu0 0.0
        %814 = vmatpush1.msra.mxu0 0.0
        %815 = vmatprep.subr.mxu0 0.0
        %816 = vmatpush1.msra.mxu0 0.0
        %817 = vmatprep.subr.mxu0 0.0
        %818 = vmatpush1.msra.mxu0 0.0
        %819 = vmatprep.subr.mxu0 0.0
        %820 = vmatpush1.msra.mxu0 0.0
        %821 = vmatprep.subr.mxu0 0.0
        %822 = vmatpush1.msra.mxu0 0.0
        %823 = vmatprep.subr.mxu0 0.0
        %824 = vmatpush1.msra.mxu0 0.0
        %825 = vmatprep.subr.mxu0 0.0
        %826 = vmatpush1.msra.mxu0 0.0
        %827 = vmatprep.subr.mxu0 0.0
        %828 = vmatpush1.msra.mxu0 0.0
        %829 = vmatprep.subr.mxu0 0.0
        %830 = vmatpush1.msra.mxu0 0.0
        %831 = vmatprep.subr.mxu0 0.0
        %832 = vmatpush1.msra.mxu0 %v797
        %833 = vmatprep.subr.mxu0 0.0
        %834 = vmatpush2.msra.mxu0 0.0
        %835 = vmatprep.subr.mxu0 0.0
        %836 = vmatpush2.msra.mxu0 0.0
        %837 = vmatprep.subr.mxu0 0.0
        %838 = vmatpush2.msra.mxu0 0.0
        %839 = vmatprep.subr.mxu0 0.0
        %840 = vmatpush2.msra.mxu0 0.0
        %841 = vmatprep.subr.mxu0 0.0
        %842 = vmatpush2.msra.mxu0 0.0
        %843 = vmatprep.subr.mxu0 0.0
        %844 = vmatpush2.msra.mxu0 0.0
        %845 = vmatprep.subr.mxu0 0.0
        %846 = vmatpush2.msra.mxu0 0.0
        %847 = vmatprep.subr.mxu0 0.0
        %848 = vmatpush2.msra.mxu0 0.0
        %849 = vmatprep.subr.mxu0 0.0
        %850 = vmatpush2.msra.mxu0 0.0
        %851 = vmatprep.subr.mxu0 0.0
        %852 = vmatpush2.msra.mxu0 0.0
        %853 = vmatprep.subr.mxu0 0.0
        %854 = vmatpush2.msra.mxu0 0.0
        %855 = vmatprep.subr.mxu0 0.0
        %856 = vmatpush2.msra.mxu0 0.0
        %857 = vmatprep.subr.mxu0 0.0
        %858 = vmatpush2.msra.mxu0 0.0
        %859 = vmatprep.subr.mxu0 0.0
        %860 = vmatpush2.msra.mxu0 0.0
        %861 = vmatprep.subr.mxu0 0.0
        %862 = vmatpush2.msra.mxu0 0.0
        %863 = vmatprep.subr.mxu0 0.0
        %864 = vmatpush2.msra.mxu0 0.0
        %865 = vmatprep.mubr.f32.mxu0 0.0
        %866 = vmatmul.mubr.f32.gmra.mxu0 %v799
        %v867 = vpop.f32.mrf.mxu0
        %v868 = vadd.f32 0.0, %v867
        %v869 = vpop.f32.mrf.mxu0
        %870 = vdwg.mxu0
        %v871 = vld [vmem:[#allocation3] sm:$0xf]
        %873 = vrot.lane.b32.xlu0 %v868, 120
        %v874 = vpop.permute.xlu0 %873
        %v876 = vadd.f32 %v871, %v874
        %877 = vst.msk [vmem:[#allocation3] sm:$0xf] %vm301, %v876
        %v878 = vadd.f32 %v868, %v633
        %879 = vst.msk [vmem:[#allocation2] sm:$0xf] %vm628, %v878
        %v880 = vld [vmem:[#allocation2] sm:$0x7]
        %v881 = vld [vmem:[#allocation2 + $0x1] sm:$0x7]
        %s882 = scalar_lea.vmem %s2, 32
        %v883 = vld [vmem:[%s882] sm:$0xff]
        %s884 = scalar_lea.vmem %s2, 40
        %v885 = vld [vmem:[%s884] sm:$0xff]
        %v887 = vsel %vm387, %v881, 0
        %889 = vmatprep.subr.mxu0 0.0
        %890 = vmatpush1.msra.mxu0 0.0
        %891 = vmatprep.subr.mxu0 0.0
        %892 = vmatpush1.msra.mxu0 0.0
        %893 = vmatprep.subr.mxu0 0.0
        %894 = vmatpush1.msra.mxu0 0.0
        %895 = vmatprep.subr.mxu0 0.0
        %896 = vmatpush1.msra.mxu0 0.0
        %897 = vmatprep.subr.mxu0 0.0
        %898 = vmatpush1.msra.mxu0 0.0
        %899 = vmatprep.subr.mxu0 0.0
        %900 = vmatpush1.msra.mxu0 0.0
        %901 = vmatprep.subr.mxu0 0.0
        %902 = vmatpush1.msra.mxu0 0.0
        %903 = vmatprep.subr.mxu0 0.0
        %904 = vmatpush1.msra.mxu0 0.0
        %905 = vmatprep.subr.mxu0 0.0
        %906 = vmatpush1.msra.mxu0 0.0
        %907 = vmatprep.subr.mxu0 0.0
        %908 = vmatpush1.msra.mxu0 0.0
        %909 = vmatprep.subr.mxu0 0.0
        %910 = vmatpush1.msra.mxu0 0.0
        %911 = vmatprep.subr.mxu0 0.0
        %912 = vmatpush1.msra.mxu0 0.0
        %913 = vmatprep.subr.mxu0 0.0
        %914 = vmatpush1.msra.mxu0 0.0
        %915 = vmatprep.subr.mxu0 0.0
        %916 = vmatpush1.msra.mxu0 0.0
        %917 = vmatprep.subr.mxu0 0.0
        %918 = vmatpush1.msra.mxu0 0.0
        %919 = vmatprep.subr.mxu0 0.0
        %920 = vmatpush1.msra.mxu0 %v885
        %921 = vmatprep.subr.mxu0 0.0
        %922 = vmatpush2.msra.mxu0 0.0
        %923 = vmatprep.subr.mxu0 0.0
        %924 = vmatpush2.msra.mxu0 0.0
        %925 = vmatprep.subr.mxu0 0.0
        %926 = vmatpush2.msra.mxu0 0.0
        %927 = vmatprep.subr.mxu0 0.0
        %928 = vmatpush2.msra.mxu0 0.0
        %929 = vmatprep.subr.mxu0 0.0
        %930 = vmatpush2.msra.mxu0 0.0
        %931 = vmatprep.subr.mxu0 0.0
        %932 = vmatpush2.msra.mxu0 0.0
        %933 = vmatprep.subr.mxu0 0.0
        %934 = vmatpush2.msra.mxu0 0.0
        %935 = vmatprep.subr.mxu0 0.0
        %936 = vmatpush2.msra.mxu0 0.0
        %937 = vmatprep.subr.mxu0 0.0
        %938 = vmatpush2.msra.mxu0 0.0
        %939 = vmatprep.subr.mxu0 0.0
        %940 = vmatpush2.msra.mxu0 0.0
        %941 = vmatprep.subr.mxu0 0.0
        %942 = vmatpush2.msra.mxu0 0.0
        %943 = vmatprep.subr.mxu0 0.0
        %944 = vmatpush2.msra.mxu0 0.0
        %945 = vmatprep.subr.mxu0 0.0
        %946 = vmatpush2.msra.mxu0 0.0
        %947 = vmatprep.subr.mxu0 0.0
        %948 = vmatpush2.msra.mxu0 0.0
        %949 = vmatprep.subr.mxu0 0.0
        %950 = vmatpush2.msra.mxu0 0.0
        %951 = vmatprep.subr.mxu0 0.0
        %952 = vmatpush2.msra.mxu0 0.0
        %953 = vmatprep.mubr.f32.mxu0 0.0
        %954 = vmatmul.mubr.f32.gmra.mxu0 %v887
        %v955 = vpop.f32.mrf.mxu0
        %v956 = vadd.f32 0.0, %v955
        %v957 = vpop.f32.mrf.mxu0
        %958 = vdwg.mxu0
        %v960 = vsel %vm387, %v880, 0
        %962 = vmatprep.subr.mxu0 0.0
        %963 = vmatpush1.msra.mxu0 0.0
        %964 = vmatprep.subr.mxu0 0.0
        %965 = vmatpush1.msra.mxu0 0.0
        %966 = vmatprep.subr.mxu0 0.0
        %967 = vmatpush1.msra.mxu0 0.0
        %968 = vmatprep.subr.mxu0 0.0
        %969 = vmatpush1.msra.mxu0 0.0
        %970 = vmatprep.subr.mxu0 0.0
        %971 = vmatpush1.msra.mxu0 0.0
        %972 = vmatprep.subr.mxu0 0.0
        %973 = vmatpush1.msra.mxu0 0.0
        %974 = vmatprep.subr.mxu0 0.0
        %975 = vmatpush1.msra.mxu0 0.0
        %976 = vmatprep.subr.mxu0 0.0
        %977 = vmatpush1.msra.mxu0 0.0
        %978 = vmatprep.subr.mxu0 0.0
        %979 = vmatpush1.msra.mxu0 0.0
        %980 = vmatprep.subr.mxu0 0.0
        %981 = vmatpush1.msra.mxu0 0.0
        %982 = vmatprep.subr.mxu0 0.0
        %983 = vmatpush1.msra.mxu0 0.0
        %984 = vmatprep.subr.mxu0 0.0
        %985 = vmatpush1.msra.mxu0 0.0
        %986 = vmatprep.subr.mxu0 0.0
        %987 = vmatpush1.msra.mxu0 0.0
        %988 = vmatprep.subr.mxu0 0.0
        %989 = vmatpush1.msra.mxu0 0.0
        %990 = vmatprep.subr.mxu0 0.0
        %991 = vmatpush1.msra.mxu0 0.0
        %992 = vmatprep.subr.mxu0 0.0
        %993 = vmatpush1.msra.mxu0 %v883
        %994 = vmatprep.subr.mxu0 0.0
        %995 = vmatpush2.msra.mxu0 0.0
        %996 = vmatprep.subr.mxu0 0.0
        %997 = vmatpush2.msra.mxu0 0.0
        %998 = vmatprep.subr.mxu0 0.0
        %999 = vmatpush2.msra.mxu0 0.0
        %1000 = vmatprep.subr.mxu0 0.0
        %1001 = vmatpush2.msra.mxu0 0.0
        %1002 = vmatprep.subr.mxu0 0.0
        %1003 = vmatpush2.msra.mxu0 0.0
        %1004 = vmatprep.subr.mxu0 0.0
        %1005 = vmatpush2.msra.mxu0 0.0
        %1006 = vmatprep.subr.mxu0 0.0
        %1007 = vmatpush2.msra.mxu0 0.0
        %1008 = vmatprep.subr.mxu0 0.0
        %1009 = vmatpush2.msra.mxu0 0.0
        %1010 = vmatprep.subr.mxu0 0.0
        %1011 = vmatpush2.msra.mxu0 0.0
        %1012 = vmatprep.subr.mxu0 0.0
        %1013 = vmatpush2.msra.mxu0 0.0
        %1014 = vmatprep.subr.mxu0 0.0
        %1015 = vmatpush2.msra.mxu0 0.0
        %1016 = vmatprep.subr.mxu0 0.0
        %1017 = vmatpush2.msra.mxu0 0.0
        %1018 = vmatprep.subr.mxu0 0.0
        %1019 = vmatpush2.msra.mxu0 0.0
        %1020 = vmatprep.subr.mxu0 0.0
        %1021 = vmatpush2.msra.mxu0 0.0
        %1022 = vmatprep.subr.mxu0 0.0
        %1023 = vmatpush2.msra.mxu0 0.0
        %1024 = vmatprep.subr.mxu0 0.0
        %1025 = vmatpush2.msra.mxu0 0.0
        %1026 = vmatprep.mubr.f32.mxu0 0.0
        %1027 = vmatmul.mubr.f32.gmra.mxu0 %v960
        %v1028 = vpop.f32.mrf.mxu0
        %v1029 = vadd.f32 %v956, %v1028
        %v1030 = vpop.f32.mrf.mxu0
        %1031 = vdwg.mxu0
        %v1032 = vtanh.pop %v1029
        %v1033 = vxor.u32 %v1029, 2147483648
        %v1034 = vmul.f32 %v1033, 1.442695
        %v1035 = vpow.pop %v1034
        %v1036 = vadd.f32 %v1035, 1.0
        %v1037 = vrcp.pop %v1036
        %v1038 = vmul.f32 1.0, %v1037
        %1040 = vrot.lane.b32.xlu0 %v1038, 120
        %v1041 = vpop.permute.xlu0 %1040
        %v1043 = vmul.f32 %v1032, %v1041
        %s1044 = scalar_lea.vmem %s3, 16
        %v1045 = vld [vmem:[%s1044] sm:$0xff]
        %v1047 = vsel %vm387, %v1043, 0
        %1049 = vmatprep.subr.mxu0 0.0
        %1050 = vmatpush1.msra.mxu0 0.0
        %1051 = vmatprep.subr.mxu0 0.0
        %1052 = vmatpush1.msra.mxu0 0.0
        %1053 = vmatprep.subr.mxu0 0.0
        %1054 = vmatpush1.msra.mxu0 0.0
        %1055 = vmatprep.subr.mxu0 0.0
        %1056 = vmatpush1.msra.mxu0 0.0
        %1057 = vmatprep.subr.mxu0 0.0
        %1058 = vmatpush1.msra.mxu0 0.0
        %1059 = vmatprep.subr.mxu0 0.0
        %1060 = vmatpush1.msra.mxu0 0.0
        %1061 = vmatprep.subr.mxu0 0.0
        %1062 = vmatpush1.msra.mxu0 0.0
        %1063 = vmatprep.subr.mxu0 0.0
        %1064 = vmatpush1.msra.mxu0 0.0
        %1065 = vmatprep.subr.mxu0 0.0
        %1066 = vmatpush1.msra.mxu0 0.0
        %1067 = vmatprep.subr.mxu0 0.0
        %1068 = vmatpush1.msra.mxu0 0.0
        %1069 = vmatprep.subr.mxu0 0.0
        %1070 = vmatpush1.msra.mxu0 0.0
        %1071 = vmatprep.subr.mxu0 0.0
        %1072 = vmatpush1.msra.mxu0 0.0
        %1073 = vmatprep.subr.mxu0 0.0
        %1074 = vmatpush1.msra.mxu0 0.0
        %1075 = vmatprep.subr.mxu0 0.0
        %1076 = vmatpush1.msra.mxu0 0.0
        %1077 = vmatprep.subr.mxu0 0.0
        %1078 = vmatpush1.msra.mxu0 0.0
        %1079 = vmatprep.subr.mxu0 0.0
        %1080 = vmatpush1.msra.mxu0 %v1045
        %1081 = vmatprep.subr.mxu0 0.0
        %1082 = vmatpush2.msra.mxu0 0.0
        %1083 = vmatprep.subr.mxu0 0.0
        %1084 = vmatpush2.msra.mxu0 0.0
        %1085 = vmatprep.subr.mxu0 0.0
        %1086 = vmatpush2.msra.mxu0 0.0
        %1087 = vmatprep.subr.mxu0 0.0
        %1088 = vmatpush2.msra.mxu0 0.0
        %1089 = vmatprep.subr.mxu0 0.0
        %1090 = vmatpush2.msra.mxu0 0.0
        %1091 = vmatprep.subr.mxu0 0.0
        %1092 = vmatpush2.msra.mxu0 0.0
        %1093 = vmatprep.subr.mxu0 0.0
        %1094 = vmatpush2.msra.mxu0 0.0
        %1095 = vmatprep.subr.mxu0 0.0
        %1096 = vmatpush2.msra.mxu0 0.0
        %1097 = vmatprep.subr.mxu0 0.0
        %1098 = vmatpush2.msra.mxu0 0.0
        %1099 = vmatprep.subr.mxu0 0.0
        %1100 = vmatpush2.msra.mxu0 0.0
        %1101 = vmatprep.subr.mxu0 0.0
        %1102 = vmatpush2.msra.mxu0 0.0
        %1103 = vmatprep.subr.mxu0 0.0
        %1104 = vmatpush2.msra.mxu0 0.0
        %1105 = vmatprep.subr.mxu0 0.0
        %1106 = vmatpush2.msra.mxu0 0.0
        %1107 = vmatprep.subr.mxu0 0.0
        %1108 = vmatpush2.msra.mxu0 0.0
        %1109 = vmatprep.subr.mxu0 0.0
        %1110 = vmatpush2.msra.mxu0 0.0
        %1111 = vmatprep.subr.mxu0 0.0
        %1112 = vmatpush2.msra.mxu0 0.0
        %1113 = vmatprep.mubr.f32.mxu0 0.0
        %1114 = vmatmul.mubr.f32.gmra.mxu0 %v1047
        %v1115 = vpop.f32.mrf.mxu0
        %v1116 = vadd.f32 0.0, %v1115
        %v1117 = vpop.f32.mrf.mxu0
        %1118 = vdwg.mxu0
        %v1119 = vld [vmem:[#allocation3] sm:$0x7]
        %1121 = vrot.lane.b32.xlu0 %v1116, 120
        %v1122 = vpop.permute.xlu0 %1121
        %v1124 = vadd.f32 %v1119, %v1122
        %vm1125 = vcmask 124928
        %1126 = vst.msk [vmem:[#allocation3] sm:$0x7] %vm1125, %v1124
        %v1127 = vadd.f32 %v1116, %v881
        %vm1128 = vcmask 59392
        %1129 = vst.msk [vmem:[#allocation2] sm:$0x7] %vm1128, %v1127
        %v1130 = vld [vmem:[#allocation2] sm:$0x3]
        %v1131 = vld [vmem:[#allocation2 + $0x1] sm:$0x3]
        %s1132 = scalar_lea.vmem %s2, 48
        %v1133 = vld [vmem:[%s1132] sm:$0xff]
        %s1134 = scalar_lea.vmem %s2, 56
        %v1135 = vld [vmem:[%s1134] sm:$0xff]
        %v1137 = vsel %vm387, %v1131, 0
        %1139 = vmatprep.subr.mxu0 0.0
        %1140 = vmatpush1.msra.mxu0 0.0
        %1141 = vmatprep.subr.mxu0 0.0
        %1142 = vmatpush1.msra.mxu0 0.0
        %1143 = vmatprep.subr.mxu0 0.0
        %1144 = vmatpush1.msra.mxu0 0.0
        %1145 = vmatprep.subr.mxu0 0.0
        %1146 = vmatpush1.msra.mxu0 0.0
        %1147 = vmatprep.subr.mxu0 0.0
        %1148 = vmatpush1.msra.mxu0 0.0
        %1149 = vmatprep.subr.mxu0 0.0
        %1150 = vmatpush1.msra.mxu0 0.0
        %1151 = vmatprep.subr.mxu0 0.0
        %1152 = vmatpush1.msra.mxu0 0.0
        %1153 = vmatprep.subr.mxu0 0.0
        %1154 = vmatpush1.msra.mxu0 0.0
        %1155 = vmatprep.subr.mxu0 0.0
        %1156 = vmatpush1.msra.mxu0 0.0
        %1157 = vmatprep.subr.mxu0 0.0
        %1158 = vmatpush1.msra.mxu0 0.0
        %1159 = vmatprep.subr.mxu0 0.0
        %1160 = vmatpush1.msra.mxu0 0.0
        %1161 = vmatprep.subr.mxu0 0.0
        %1162 = vmatpush1.msra.mxu0 0.0
        %1163 = vmatprep.subr.mxu0 0.0
        %1164 = vmatpush1.msra.mxu0 0.0
        %1165 = vmatprep.subr.mxu0 0.0
        %1166 = vmatpush1.msra.mxu0 0.0
        %1167 = vmatprep.subr.mxu0 0.0
        %1168 = vmatpush1.msra.mxu0 0.0
        %1169 = vmatprep.subr.mxu0 0.0
        %1170 = vmatpush1.msra.mxu0 %v1135
        %1171 = vmatprep.subr.mxu0 0.0
        %1172 = vmatpush2.msra.mxu0 0.0
        %1173 = vmatprep.subr.mxu0 0.0
        %1174 = vmatpush2.msra.mxu0 0.0
        %1175 = vmatprep.subr.mxu0 0.0
        %1176 = vmatpush2.msra.mxu0 0.0
        %1177 = vmatprep.subr.mxu0 0.0
        %1178 = vmatpush2.msra.mxu0 0.0
        %1179 = vmatprep.subr.mxu0 0.0
        %1180 = vmatpush2.msra.mxu0 0.0
        %1181 = vmatprep.subr.mxu0 0.0
        %1182 = vmatpush2.msra.mxu0 0.0
        %1183 = vmatprep.subr.mxu0 0.0
        %1184 = vmatpush2.msra.mxu0 0.0
        %1185 = vmatprep.subr.mxu0 0.0
        %1186 = vmatpush2.msra.mxu0 0.0
        %1187 = vmatprep.subr.mxu0 0.0
        %1188 = vmatpush2.msra.mxu0 0.0
        %1189 = vmatprep.subr.mxu0 0.0
        %1190 = vmatpush2.msra.mxu0 0.0
        %1191 = vmatprep.subr.mxu0 0.0
        %1192 = vmatpush2.msra.mxu0 0.0
        %1193 = vmatprep.subr.mxu0 0.0
        %1194 = vmatpush2.msra.mxu0 0.0
        %1195 = vmatprep.subr.mxu0 0.0
        %1196 = vmatpush2.msra.mxu0 0.0
        %1197 = vmatprep.subr.mxu0 0.0
        %1198 = vmatpush2.msra.mxu0 0.0
        %1199 = vmatprep.subr.mxu0 0.0
        %1200 = vmatpush2.msra.mxu0 0.0
        %1201 = vmatprep.subr.mxu0 0.0
        %1202 = vmatpush2.msra.mxu0 0.0
        %1203 = vmatprep.mubr.f32.mxu0 0.0
        %1204 = vmatmul.mubr.f32.gmra.mxu0 %v1137
        %v1205 = vpop.f32.mrf.mxu0
        %v1206 = vadd.f32 0.0, %v1205
        %v1207 = vpop.f32.mrf.mxu0
        %1208 = vdwg.mxu0
        %v1210 = vsel %vm387, %v1130, 0
        %1212 = vmatprep.subr.mxu0 0.0
        %1213 = vmatpush1.msra.mxu0 0.0
        %1214 = vmatprep.subr.mxu0 0.0
        %1215 = vmatpush1.msra.mxu0 0.0
        %1216 = vmatprep.subr.mxu0 0.0
        %1217 = vmatpush1.msra.mxu0 0.0
        %1218 = vmatprep.subr.mxu0 0.0
        %1219 = vmatpush1.msra.mxu0 0.0
        %1220 = vmatprep.subr.mxu0 0.0
        %1221 = vmatpush1.msra.mxu0 0.0
        %1222 = vmatprep.subr.mxu0 0.0
        %1223 = vmatpush1.msra.mxu0 0.0
        %1224 = vmatprep.subr.mxu0 0.0
        %1225 = vmatpush1.msra.mxu0 0.0
        %1226 = vmatprep.subr.mxu0 0.0
        %1227 = vmatpush1.msra.mxu0 0.0
        %1228 = vmatprep.subr.mxu0 0.0
        %1229 = vmatpush1.msra.mxu0 0.0
        %1230 = vmatprep.subr.mxu0 0.0
        %1231 = vmatpush1.msra.mxu0 0.0
        %1232 = vmatprep.subr.mxu0 0.0
        %1233 = vmatpush1.msra.mxu0 0.0
        %1234 = vmatprep.subr.mxu0 0.0
        %1235 = vmatpush1.msra.mxu0 0.0
        %1236 = vmatprep.subr.mxu0 0.0
        %1237 = vmatpush1.msra.mxu0 0.0
        %1238 = vmatprep.subr.mxu0 0.0
        %1239 = vmatpush1.msra.mxu0 0.0
        %1240 = vmatprep.subr.mxu0 0.0
        %1241 = vmatpush1.msra.mxu0 0.0
        %1242 = vmatprep.subr.mxu0 0.0
        %1243 = vmatpush1.msra.mxu0 %v1133
        %1244 = vmatprep.subr.mxu0 0.0
        %1245 = vmatpush2.msra.mxu0 0.0
        %1246 = vmatprep.subr.mxu0 0.0
        %1247 = vmatpush2.msra.mxu0 0.0
        %1248 = vmatprep.subr.mxu0 0.0
        %1249 = vmatpush2.msra.mxu0 0.0
        %1250 = vmatprep.subr.mxu0 0.0
        %1251 = vmatpush2.msra.mxu0 0.0
        %1252 = vmatprep.subr.mxu0 0.0
        %1253 = vmatpush2.msra.mxu0 0.0
        %1254 = vmatprep.subr.mxu0 0.0
        %1255 = vmatpush2.msra.mxu0 0.0
        %1256 = vmatprep.subr.mxu0 0.0
        %1257 = vmatpush2.msra.mxu0 0.0
        %1258 = vmatprep.subr.mxu0 0.0
        %1259 = vmatpush2.msra.mxu0 0.0
        %1260 = vmatprep.subr.mxu0 0.0
        %1261 = vmatpush2.msra.mxu0 0.0
        %1262 = vmatprep.subr.mxu0 0.0
        %1263 = vmatpush2.msra.mxu0 0.0
        %1264 = vmatprep.subr.mxu0 0.0
        %1265 = vmatpush2.msra.mxu0 0.0
        %1266 = vmatprep.subr.mxu0 0.0
        %1267 = vmatpush2.msra.mxu0 0.0
        %1268 = vmatprep.subr.mxu0 0.0
        %1269 = vmatpush2.msra.mxu0 0.0
        %1270 = vmatprep.subr.mxu0 0.0
        %1271 = vmatpush2.msra.mxu0 0.0
        %1272 = vmatprep.subr.mxu0 0.0
        %1273 = vmatpush2.msra.mxu0 0.0
        %1274 = vmatprep.subr.mxu0 0.0
        %1275 = vmatpush2.msra.mxu0 0.0
        %1276 = vmatprep.mubr.f32.mxu0 0.0
        %1277 = vmatmul.mubr.f32.gmra.mxu0 %v1210
        %v1278 = vpop.f32.mrf.mxu0
        %v1279 = vadd.f32 %v1206, %v1278
        %v1280 = vpop.f32.mrf.mxu0
        %1281 = vdwg.mxu0
        %v1282 = vtanh.pop %v1279
        %v1283 = vxor.u32 %v1279, 2147483648
        %v1284 = vmul.f32 %v1283, 1.442695
        %v1285 = vpow.pop %v1284
        %v1286 = vadd.f32 %v1285, 1.0
        %v1287 = vrcp.pop %v1286
        %v1288 = vmul.f32 1.0, %v1287
        %1290 = vrot.lane.b32.xlu0 %v1288, 120
        %v1291 = vpop.permute.xlu0 %1290
        %v1293 = vmul.f32 %v1282, %v1291
        %s1294 = scalar_lea.vmem %s3, 24
        %v1295 = vld [vmem:[%s1294] sm:$0xff]
        %v1297 = vsel %vm387, %v1293, 0
        %1299 = vmatprep.subr.mxu0 0.0
        %1300 = vmatpush1.msra.mxu0 0.0
        %1301 = vmatprep.subr.mxu0 0.0
        %1302 = vmatpush1.msra.mxu0 0.0
        %1303 = vmatprep.subr.mxu0 0.0
        %1304 = vmatpush1.msra.mxu0 0.0
        %1305 = vmatprep.subr.mxu0 0.0
        %1306 = vmatpush1.msra.mxu0 0.0
        %1307 = vmatprep.subr.mxu0 0.0
        %1308 = vmatpush1.msra.mxu0 0.0
        %1309 = vmatprep.subr.mxu0 0.0
        %1310 = vmatpush1.msra.mxu0 0.0
        %1311 = vmatprep.subr.mxu0 0.0
        %1312 = vmatpush1.msra.mxu0 0.0
        %1313 = vmatprep.subr.mxu0 0.0
        %1314 = vmatpush1.msra.mxu0 0.0
        %1315 = vmatprep.subr.mxu0 0.0
        %1316 = vmatpush1.msra.mxu0 0.0
        %1317 = vmatprep.subr.mxu0 0.0
        %1318 = vmatpush1.msra.mxu0 0.0
        %1319 = vmatprep.subr.mxu0 0.0
        %1320 = vmatpush1.msra.mxu0 0.0
        %1321 = vmatprep.subr.mxu0 0.0
        %1322 = vmatpush1.msra.mxu0 0.0
        %1323 = vmatprep.subr.mxu0 0.0
        %1324 = vmatpush1.msra.mxu0 0.0
        %1325 = vmatprep.subr.mxu0 0.0
        %1326 = vmatpush1.msra.mxu0 0.0
        %1327 = vmatprep.subr.mxu0 0.0
        %1328 = vmatpush1.msra.mxu0 0.0
        %1329 = vmatprep.subr.mxu0 0.0
        %1330 = vmatpush1.msra.mxu0 %v1295
        %1331 = vmatprep.subr.mxu0 0.0
        %1332 = vmatpush2.msra.mxu0 0.0
        %1333 = vmatprep.subr.mxu0 0.0
        %1334 = vmatpush2.msra.mxu0 0.0
        %1335 = vmatprep.subr.mxu0 0.0
        %1336 = vmatpush2.msra.mxu0 0.0
        %1337 = vmatprep.subr.mxu0 0.0
        %1338 = vmatpush2.msra.mxu0 0.0
        %1339 = vmatprep.subr.mxu0 0.0
        %1340 = vmatpush2.msra.mxu0 0.0
        %1341 = vmatprep.subr.mxu0 0.0
        %1342 = vmatpush2.msra.mxu0 0.0
        %1343 = vmatprep.subr.mxu0 0.0
        %1344 = vmatpush2.msra.mxu0 0.0
        %1345 = vmatprep.subr.mxu0 0.0
        %1346 = vmatpush2.msra.mxu0 0.0
        %1347 = vmatprep.subr.mxu0 0.0
        %1348 = vmatpush2.msra.mxu0 0.0
        %1349 = vmatprep.subr.mxu0 0.0
        %1350 = vmatpush2.msra.mxu0 0.0
        %1351 = vmatprep.subr.mxu0 0.0
        %1352 = vmatpush2.msra.mxu0 0.0
        %1353 = vmatprep.subr.mxu0 0.0
        %1354 = vmatpush2.msra.mxu0 0.0
        %1355 = vmatprep.subr.mxu0 0.0
        %1356 = vmatpush2.msra.mxu0 0.0
        %1357 = vmatprep.subr.mxu0 0.0
        %1358 = vmatpush2.msra.mxu0 0.0
        %1359 = vmatprep.subr.mxu0 0.0
        %1360 = vmatpush2.msra.mxu0 0.0
        %1361 = vmatprep.subr.mxu0 0.0
        %1362 = vmatpush2.msra.mxu0 0.0
        %1363 = vmatprep.mubr.f32.mxu0 0.0
        %1364 = vmatmul.mubr.f32.gmra.mxu0 %v1297
        %v1365 = vpop.f32.mrf.mxu0
        %v1366 = vadd.f32 0.0, %v1365
        %v1367 = vpop.f32.mrf.mxu0
        %1368 = vdwg.mxu0
        %v1369 = vld [vmem:[#allocation3] sm:$0x3]
        %1371 = vrot.lane.b32.xlu0 %v1366, 120
        %v1372 = vpop.permute.xlu0 %1371
        %v1374 = vadd.f32 %v1369, %v1372
        %vm1375 = vcmask 123904
        %1376 = vst.msk [vmem:[#allocation3] sm:$0x3] %vm1375, %v1374
        %v1377 = vld [vmem:[#allocation3] sm:$0xf]
        %v1378 = vmax.f32 %v1377, 0.0
        %v1379 = vld [vmem:[%s4] sm:$0xff]
        %v1380 = vld [vmem:[%s4 + $0x8] sm:$0xff]
        %v1381 = vld [vmem:[%s5] sm:$0x1]
        %v1383 = vlaneseq
        %v1384 = vshrl.u32 %v1383, 7
        %v1385 = vsub.s32 0, %v1384
        %v1386 = vrot.slane %v1381, %v1385
        %v1389 = vsel %vm306, %v1378, 0
        %1391 = vmatprep.subr.mxu0 0.0
        %1392 = vmatpush1.msra.mxu0 0.0
        %1393 = vmatprep.subr.mxu0 0.0
        %1394 = vmatpush1.msra.mxu0 0.0
        %1395 = vmatprep.subr.mxu0 0.0
        %1396 = vmatpush1.msra.mxu0 0.0
        %1397 = vmatprep.subr.mxu0 0.0
        %1398 = vmatpush1.msra.mxu0 0.0
        %1399 = vmatprep.subr.mxu0 0.0
        %1400 = vmatpush1.msra.mxu0 0.0
        %1401 = vmatprep.subr.mxu0 0.0
        %1402 = vmatpush1.msra.mxu0 0.0
        %1403 = vmatprep.subr.mxu0 0.0
        %1404 = vmatpush1.msra.mxu0 0.0
        %1405 = vmatprep.subr.mxu0 0.0
        %1406 = vmatpush1.msra.mxu0 0.0
        %1407 = vmatprep.subr.mxu0 0.0
        %1408 = vmatpush1.msra.mxu0 0.0
        %1409 = vmatprep.subr.mxu0 0.0
        %1410 = vmatpush1.msra.mxu0 0.0
        %1411 = vmatprep.subr.mxu0 0.0
        %1412 = vmatpush1.msra.mxu0 0.0
        %1413 = vmatprep.subr.mxu0 0.0
        %1414 = vmatpush1.msra.mxu0 0.0
        %1415 = vmatprep.subr.mxu0 0.0
        %1416 = vmatpush1.msra.mxu0 0.0
        %1417 = vmatprep.subr.mxu0 0.0
        %1418 = vmatpush1.msra.mxu0 0.0
        %1419 = vmatprep.subr.mxu0 0.0
        %1420 = vmatpush1.msra.mxu0 %v1380
        %1421 = vmatprep.subr.mxu0 0.0
        %1422 = vmatpush1.msra.mxu0 %v1379
        %1423 = vmatprep.subr.mxu0 0.0
        %1424 = vmatpush2.msra.mxu0 0.0
        %1425 = vmatprep.subr.mxu0 0.0
        %1426 = vmatpush2.msra.mxu0 0.0
        %1427 = vmatprep.subr.mxu0 0.0
        %1428 = vmatpush2.msra.mxu0 0.0
        %1429 = vmatprep.subr.mxu0 0.0
        %1430 = vmatpush2.msra.mxu0 0.0
        %1431 = vmatprep.subr.mxu0 0.0
        %1432 = vmatpush2.msra.mxu0 0.0
        %1433 = vmatprep.subr.mxu0 0.0
        %1434 = vmatpush2.msra.mxu0 0.0
        %1435 = vmatprep.subr.mxu0 0.0
        %1436 = vmatpush2.msra.mxu0 0.0
        %1437 = vmatprep.subr.mxu0 0.0
        %1438 = vmatpush2.msra.mxu0 0.0
        %1439 = vmatprep.subr.mxu0 0.0
        %1440 = vmatpush2.msra.mxu0 0.0
        %1441 = vmatprep.subr.mxu0 0.0
        %1442 = vmatpush2.msra.mxu0 0.0
        %1443 = vmatprep.subr.mxu0 0.0
        %1444 = vmatpush2.msra.mxu0 0.0
        %1445 = vmatprep.subr.mxu0 0.0
        %1446 = vmatpush2.msra.mxu0 0.0
        %1447 = vmatprep.subr.mxu0 0.0
        %1448 = vmatpush2.msra.mxu0 0.0
        %1449 = vmatprep.subr.mxu0 0.0
        %1450 = vmatpush2.msra.mxu0 0.0
        %1451 = vmatprep.subr.mxu0 0.0
        %1452 = vmatpush2.msra.mxu0 0.0
        %1453 = vmatprep.subr.mxu0 0.0
        %1454 = vmatpush2.msra.mxu0 0.0
        %1455 = vmatprep.mubr.f32.mxu0 0.0
        %1456 = vmatmul.mubr.f32.gmra.mxu0 %v1389
        %v1457 = vpop.f32.mrf.mxu0
        %v1458 = vadd.f32 %v1386, %v1457
        %v1459 = vpop.f32.mrf.mxu0
        %1460 = vdwg.mxu0
        %v1461 = vmax.f32 %v1458, 0.0
        %v1462 = vld [vmem:[%s6] sm:$0xff]
        %v1463 = vld [vmem:[%s6 + $0x8] sm:$0xff]
        %v1464 = vld [vmem:[%s7] sm:$0x1]
        %v1466 = vlaneseq
        %v1467 = vshrl.u32 %v1466, 7
        %v1468 = vsub.s32 0, %v1467
        %v1469 = vrot.slane %v1464, %v1468
        %v1472 = vsel %vm306, %v1461, 0
        %1474 = vmatprep.subr.mxu0 0.0
        %1475 = vmatpush1.msra.mxu0 0.0
        %1476 = vmatprep.subr.mxu0 0.0
        %1477 = vmatpush1.msra.mxu0 0.0
        %1478 = vmatprep.subr.mxu0 0.0
        %1479 = vmatpush1.msra.mxu0 0.0
        %1480 = vmatprep.subr.mxu0 0.0
        %1481 = vmatpush1.msra.mxu0 0.0
        %1482 = vmatprep.subr.mxu0 0.0
        %1483 = vmatpush1.msra.mxu0 0.0
        %1484 = vmatprep.subr.mxu0 0.0
        %1485 = vmatpush1.msra.mxu0 0.0
        %1486 = vmatprep.subr.mxu0 0.0
        %1487 = vmatpush1.msra.mxu0 0.0
        %1488 = vmatprep.subr.mxu0 0.0
        %1489 = vmatpush1.msra.mxu0 0.0
        %1490 = vmatprep.subr.mxu0 0.0
        %1491 = vmatpush1.msra.mxu0 0.0
        %1492 = vmatprep.subr.mxu0 0.0
        %1493 = vmatpush1.msra.mxu0 0.0
        %1494 = vmatprep.subr.mxu0 0.0
        %1495 = vmatpush1.msra.mxu0 0.0
        %1496 = vmatprep.subr.mxu0 0.0
        %1497 = vmatpush1.msra.mxu0 0.0
        %1498 = vmatprep.subr.mxu0 0.0
        %1499 = vmatpush1.msra.mxu0 0.0
        %1500 = vmatprep.subr.mxu0 0.0
        %1501 = vmatpush1.msra.mxu0 0.0
        %1502 = vmatprep.subr.mxu0 0.0
        %1503 = vmatpush1.msra.mxu0 %v1463
        %1504 = vmatprep.subr.mxu0 0.0
        %1505 = vmatpush1.msra.mxu0 %v1462
        %1506 = vmatprep.subr.mxu0 0.0
        %1507 = vmatpush2.msra.mxu0 0.0
        %1508 = vmatprep.subr.mxu0 0.0
        %1509 = vmatpush2.msra.mxu0 0.0
        %1510 = vmatprep.subr.mxu0 0.0
        %1511 = vmatpush2.msra.mxu0 0.0
        %1512 = vmatprep.subr.mxu0 0.0
        %1513 = vmatpush2.msra.mxu0 0.0
        %1514 = vmatprep.subr.mxu0 0.0
        %1515 = vmatpush2.msra.mxu0 0.0
        %1516 = vmatprep.subr.mxu0 0.0
        %1517 = vmatpush2.msra.mxu0 0.0
        %1518 = vmatprep.subr.mxu0 0.0
        %1519 = vmatpush2.msra.mxu0 0.0
        %1520 = vmatprep.subr.mxu0 0.0
        %1521 = vmatpush2.msra.mxu0 0.0
        %1522 = vmatprep.subr.mxu0 0.0
        %1523 = vmatpush2.msra.mxu0 0.0
        %1524 = vmatprep.subr.mxu0 0.0
        %1525 = vmatpush2.msra.mxu0 0.0
        %1526 = vmatprep.subr.mxu0 0.0
        %1527 = vmatpush2.msra.mxu0 0.0
        %1528 = vmatprep.subr.mxu0 0.0
        %1529 = vmatpush2.msra.mxu0 0.0
        %1530 = vmatprep.subr.mxu0 0.0
        %1531 = vmatpush2.msra.mxu0 0.0
        %1532 = vmatprep.subr.mxu0 0.0
        %1533 = vmatpush2.msra.mxu0 0.0
        %1534 = vmatprep.subr.mxu0 0.0
        %1535 = vmatpush2.msra.mxu0 0.0
        %1536 = vmatprep.subr.mxu0 0.0
        %1537 = vmatpush2.msra.mxu0 0.0
        %1538 = vmatprep.mubr.f32.mxu0 0.0
        %1539 = vmatmul.mubr.f32.gmra.mxu0 %v1472
        %v1540 = vpop.f32.mrf.mxu0
        %v1541 = vadd.f32 %v1469, %v1540
        %v1542 = vpop.f32.mrf.mxu0
        %1543 = vdwg.mxu0
        %1544 = vst.msk [vmem:[%s296] sm:$0xf] %vm301, %v1541
        %s1545 = sand.u32 %s203, 1
        %s1546 = scalar_lea.sflag [#allocation5], %s1545
        %s1547 = sand.u32 %s203, 1
        %s1548 = smul.addr %s1547, 4
        %s1549 = scalar_lea.vmem [#allocation4], %s1548
        // Predicated region
        $region53: #{wavenet_forward.1} parent=51 // pred_check
          %p1550 = pneg %p213
        $region54: #{wavenet_forward.1} parent=51 // pred_check_branch
          %1552 = sbr.rel (%p1550) target = $region56
        $region55: #{wavenet_forward.1} parent=51 // pred_region
          %s1554 = ssub.s32 64, 64
          %1555 = vsyncadd %s1546, %s1554
          %s1556 = smul.addr %s22, 64
          %s1557 = scalar_lea.hbm %s8, %s1556
          %s1559 = sshll.u32 %s1549, 4
          %s1560 = int_to_ptr.vmem [resolvable:$true] %s1559
          %1562 = dma.vmem_to_hbm [thread:$0]  %s1560, 64, %s1557, %s1546
        $region56: #{wavenet_forward.1} parent=51 // pred_fallthru
          _
      $region52: #{wavenet_forward.1} parent=5 // pred_fallthru
        _
      %p1563 = scmp.le.s32.totalorder 2, %s17
      // Predicated region
      $region57: #{wavenet_forward.1} parent=5 // pred_check
        %p1564 = pneg %p1563
      $region58: #{wavenet_forward.1} parent=5 // pred_check_branch
        %1566 = sbr.rel (%p1564) target = $region60
      $region59: #{wavenet_forward.1} parent=5 // pred_region
        %s1567 = ssub.s32 %s17, 2
        // Predicated region
        $region61: #{wavenet_forward.1} parent=59 // pred_check
          %p1568 = pneg %p219
        $region62: #{wavenet_forward.1} parent=59 // pred_check_branch
          %1570 = sbr.rel (%p1568) target = $region64
        $region63: #{wavenet_forward.1} parent=59 // pred_region
          %s1571 = sand.u32 %s204, 1
          %s1572 = scalar_lea.sflag [#allocation5], %s1571
          %s1573 = sand.u32 %s204, 1
          %s1574 = smul.addr %s1573, 4
          %s1575 = scalar_lea.vmem [#allocation4], %s1574
          %1576 = dma.done %s1572, 64
        $region64: #{wavenet_forward.1} parent=59 // pred_fallthru
          _
      $region60: #{wavenet_forward.1} parent=5 // pred_fallthru
        _
    $region6: #{wavenet_forward.1} parent=1 // loop_footer
      %s21 = sadd.s32 1, %s17
    $region7: #{wavenet_forward.1} parent=1 // loop_footer_branch
      %16 = sbr.rel target = $region3
    $region8: #{wavenet_forward.1} parent=1 // loop_exit
      _
    %1577 = vsyncpa [#allocation5], 1
    %s1578 = scalar_lea.sflag [#allocation5], 1
    %1579 = vsyncpa %s1578, 1

</llo_original>
